<compile_context>
chip_gen: v7x
topology: tpu7x:2x2x1
jax: 0.10.0
libtpu: 0.0.40
codegen_flags: <defaults>
</compile_context>

<pallas_src>
import functools
import math
import string

import jax
import jax.numpy as jnp
from jax.experimental import pallas as pl
from jax.experimental.pallas import tpu as pltpu


# ---------------------------------------------------------------------------
# Pallas kernel: one grid step per CHUNK of timesteps
# ---------------------------------------------------------------------------
def rnn_chunk_kernel(x_ref, h0_ref, wx_ref, wh_ref, b_ref,
                     out_ref, h_ref, xproj_ref, *,
                     chunk, batch, hidden_size, seq_len):
    c = pl.program_id(0)

    # Initialize the resident hidden-state block from h0 on the first chunk.
    @pl.when(c == 0)
    def _():
        h_ref[...] = h0_ref[...]

    # Hoisted input projection + bias for the WHOLE chunk: a single MXU matmul
    # with M = chunk*batch instead of `chunk` matmuls with M = batch.
    # The bias already carries the -1e30 softmax pad mask (see prep_params).
    xproj_ref[...] = (jnp.dot(x_ref[...], wx_ref[...],
                              preferred_element_type=jnp.float32)
                      + b_ref[...])

    wh = wh_ref[...]               # (hidden, fused), VMEM-resident
    t0 = c * chunk                 # global index of this chunk's first step

    def step(t, h):
        row = pl.multiple_of(t * batch, batch)
        # y lanes [0:hidden) -> new hidden, [hidden:) -> padded logits.
        y = xproj_ref[pl.ds(row, batch), :] + jnp.dot(
            h, wh, preferred_element_type=jnp.float32)
        h_new = y[:, :hidden_size]
        logits = y[:, hidden_size:]            # padded lanes are exactly -1e30

        # Numerically-stable log_softmax over the lane axis; exp of the padded
        # lanes underflows to 0 so they don't affect the normalization.
        m = jnp.max(logits, axis=1, keepdims=True)
        z = logits - m
        lse = jnp.log(jnp.sum(jnp.exp(z), axis=1, keepdims=True))
        out_ref[pl.ds(row, batch), :] = (z - lse).astype(out_ref.dtype)

        # Freeze the hidden state on padded (t0 + t >= seq_len) timesteps.
        return jnp.where(t0 + t < seq_len, h_new, h)

    # Unrolled so the LLO scheduler can overlap step t+1's independent work
    # (xproj load, output store) under step t's dependent h @ W_h.
    h_ref[...] = jax.lax.fori_loop(0, chunk, step, h_ref[...], unroll=True)


# ---------------------------------------------------------------------------
# Wrapper: one pallas_call for the whole sequence
# ---------------------------------------------------------------------------
def rnn_sequence(x_seq, h0, W_x, W_h, b, *, output_size, chunk=8):
    """x_seq: (seq, B, input_size) one-hot; h0: (B, hidden).
    Returns (log_probs: (seq, B, output_size), h_final: (B, hidden))."""
    seq_len, batch, input_size = x_seq.shape
    hidden_size = h0.shape[1]
    fused = W_x.shape[1]                     # hidden_size + out_pad
    out_pad = fused - hidden_size
    assert out_pad >= output_size, "padded logit width must cover output_size"

    n_chunks = pl.cdiv(seq_len, chunk)
    seq_pad = n_chunks * chunk
    if seq_pad != seq_len:
        x_seq = jnp.pad(x_seq, ((0, seq_pad - seq_len), (0, 0), (0, 0)))
    # Lane-preserving flatten: (seq_pad, B, I) -> (seq_pad*B, I) done in JAX
    # so the kernel needs no in-kernel reshape.
    x2d = x_seq.reshape(seq_pad * batch, input_size)

    kernel = functools.partial(rnn_chunk_kernel,
                               chunk=chunk, batch=batch,
                               hidden_size=hidden_size, seq_len=seq_len)

    out2d, h_final = pl.pallas_call(
        kernel,
        grid=(n_chunks,),
        in_specs=[
            # One chunk of timesteps per grid iteration.
            pl.BlockSpec((chunk * batch, input_size), lambda c: (c, 0)),
            # h0 and all parameters: same block every step -> VMEM-resident,
            # DMA'd HBM->VMEM exactly once.
            pl.BlockSpec((batch, hidden_size), lambda c: (0, 0)),
            pl.BlockSpec((input_size, fused), lambda c: (0, 0)),
            pl.BlockSpec((hidden_size, fused), lambda c: (0, 0)),
            pl.BlockSpec((1, fused), lambda c: (0, 0)),
        ],
        out_specs=(
            # Per-chunk lane-dense (chunk*B, 128) log-prob writebacks.
            pl.BlockSpec((chunk * batch, out_pad), lambda c: (c, 0)),
            # Final hidden: constant block index -> acts as the loop carry.
            pl.BlockSpec((batch, hidden_size), lambda c: (0, 0)),
        ),
        out_shape=(
            jax.ShapeDtypeStruct((seq_pad * batch, out_pad), jnp.float32),
            jax.ShapeDtypeStruct((batch, hidden_size), jnp.float32),
        ),
        scratch_shapes=[
            # Hoisted per-chunk input projection (x @ W_x + b).
            pltpu.VMEM((chunk * batch, fused), jnp.float32),
        ],
        compiler_params=pltpu.CompilerParams(
            dimension_semantics=("arbitrary",)),   # recurrence -> sequential
    )(x2d, h0, W_x, W_h, b)

    out = out2d.reshape(seq_pad, batch, out_pad)[:seq_len, :, :output_size]
    return out, h_final


# ---------------------------------------------------------------------------
# One-time parameter preparation (hoisted out of the time loop)
# ---------------------------------------------------------------------------
def prep_params(params, input_size, hidden_size, output_size, out_pad):
    assert out_pad >= output_size
    w_i2h, b_i2h = params["w_i2h"], params["b_i2h"]   # (H, I+H), (H,)
    w_i2o, b_i2o = params["w_i2o"], params["b_i2o"]   # (O, I+H), (O,)

    w_xh = w_i2h[:, :input_size].T        # (I, H)
    w_hh = w_i2h[:, input_size:].T        # (H, H)
    w_xo = w_i2o[:, :input_size].T        # (I, O)
    w_ho = w_i2o[:, input_size:].T        # (H, O)

    pad = out_pad - output_size
    w_xo = jnp.pad(w_xo, ((0, 0), (0, pad)))          # (I, out_pad), zero pad
    w_ho = jnp.pad(w_ho, ((0, 0), (0, pad)))          # (H, out_pad), zero pad
    # Bake the softmax padding mask into the bias: padded logit lanes become
    # exactly -1e30 (weight pad columns are zero) -> no per-step mask ops.
    b_o = jnp.pad(b_i2o, (0, pad), constant_values=-1e30)

    W_x = jnp.concatenate([w_xh, w_xo], axis=1)       # (I, H + out_pad)
    W_h = jnp.concatenate([w_hh, w_ho], axis=1)       # (H, H + out_pad)
    b = jnp.concatenate([b_i2h, b_o]).reshape(1, -1)  # (1, H + out_pad)
    return W_x, W_h, b


# ---------------------------------------------------------------------------
# Deterministic parameter init (PyTorch nn.Linear-style uniform bounds)
# ---------------------------------------------------------------------------
def init_params(key, input_size, hidden_size, output_size):
    k1, k2, k3, k4 = jax.random.split(key, 4)
    fan_in = input_size + hidden_size
    bound = 1.0 / math.sqrt(fan_in)
    return {
        "w_i2h": jax.random.uniform(k1, (hidden_size, fan_in), jnp.float32,
                                    -bound, bound),
        "b_i2h": jax.random.uniform(k2, (hidden_size,), jnp.float32,
                                    -bound, bound),
        "w_i2o": jax.random.uniform(k3, (output_size, fan_in), jnp.float32,
                                    -bound, bound),
        "b_i2o": jax.random.uniform(k4, (output_size,), jnp.float32,
                                    -bound, bound),
    }


# ---------------------------------------------------------------------------
# Helpers mirroring the PyTorch script
# ---------------------------------------------------------------------------
ALL_LETTERS = string.ascii_letters + " .,;'"
N_LETTERS = len(ALL_LETTERS)  # 57


def line_to_tensor(line):
    # (seq_len, 1, n_letters) one-hot, like the PyTorch helper
    idx = jnp.array([ALL_LETTERS.find(c) for c in line], dtype=jnp.int32)
    return jax.nn.one_hot(idx, N_LETTERS, dtype=jnp.float32)[:, None, :]


def reference_step(x, h, params):
    combined = jnp.concatenate([x, h], axis=1)
    h_new = combined @ params["w_i2h"].T + params["b_i2h"]
    logits = combined @ params["w_i2o"].T + params["b_i2o"]
    return jax.nn.log_softmax(logits, axis=1), h_new


if __name__ == "__main__":
    # Small, module-consistent sizes: one-hot letters (57), batch = 1.
    input_size = N_LETTERS   # 57
    hidden_size = 128        # small stand-in for n_hidden = 512 (multiple of 128)
    output_size = 18         # e.g. number of name categories
    out_pad = 128            # lane-dense padded logits width

    key = jax.random.PRNGKey(0)
    params = init_params(key, input_size, hidden_size, output_size)
    W_x, W_h, b = prep_params(params, input_size, hidden_size, output_size, out_pad)

    line = line_to_tensor("vilar do pinheiro")        # (17, 1, 57)
    h0 = jnp.zeros((1, hidden_size), jnp.float32)

    run = jax.jit(rnn_sequence, static_argnames=("output_size", "chunk"))
    outputs, hidden = run(line, h0, W_x, W_h, b,
                          output_size=output_size, chunk=8)
    outputs = jax.block_until_ready(outputs)          # (seq, 1, output_size)
    hidden = jax.block_until_ready(hidden)            # (1, hidden_size)

    # Correctness check against a plain-JAX reference run of the module loop.
    h_ref = h0
    outs_ref = []
    for t in range(line.shape[0]):
        o_ref, h_ref = reference_step(line[t], h_ref, params)
        outs_ref.append(o_ref)
    outs_ref = jnp.stack(outs_ref)                    # (seq, 1, output_size)

    assert outputs.shape == (line.shape[0], 1, output_size)
    assert hidden.shape == (1, hidden_size)
    assert jnp.allclose(outputs, outs_ref, atol=1e-4), "output mismatch"
    assert jnp.allclose(hidden, h_ref, atol=1e-4), "hidden mismatch"

    print("KERNEL_OK")
</pallas_src>

<mosaic_0001>
module attributes {stable_mosaic.version = 11 : i64} {
  func.func @rnn_chunk_kernel(%arg0: i32, %arg1: memref<8x57xf32, #tpu.memory_space<vmem>>, %arg2: memref<1x128xf32, #tpu.memory_space<vmem>>, %arg3: memref<57x256xf32, #tpu.memory_space<vmem>>, %arg4: memref<128x256xf32, #tpu.memory_space<vmem>>, %arg5: memref<1x256xf32, #tpu.memory_space<vmem>>, %arg6: memref<8x128xf32, #tpu.memory_space<vmem>>, %arg7: memref<1x128xf32, #tpu.memory_space<vmem>>, %arg8: memref<8x256xf32, #tpu.memory_space<vmem>>) attributes {dimension_semantics = [#tpu.dimension_semantics<arbitrary>], iteration_bounds = array<i64: 3>, scalar_prefetch = 0 : i64, scratch_operands = 1 : i64, tpu.core_type = #tpu.core_type<tc>, window_params = [{transform_indices = @transform_0, window_bounds = array<i64: 8, 57>}, {pipeline_mode = #tpu.pipeline_mode<synchronous>, transform_indices = @transform_1, window_bounds = array<i64: 1, 128>}, {pipeline_mode = #tpu.pipeline_mode<synchronous>, transform_indices = @transform_2, window_bounds = array<i64: 57, 256>}, {pipeline_mode = #tpu.pipeline_mode<synchronous>, transform_indices = @transform_3, window_bounds = array<i64: 128, 256>}, {pipeline_mode = #tpu.pipeline_mode<synchronous>, transform_indices = @transform_4, window_bounds = array<i64: 1, 256>}, {transform_indices = @transform_5, window_bounds = array<i64: 8, 128>}, {pipeline_mode = #tpu.pipeline_mode<synchronous>, transform_indices = @transform_6, window_bounds = array<i64: 1, 128>}]} {
    %c0_i32 = arith.constant 0 : i32
    %0 = arith.cmpi eq, %arg0, %c0_i32 : i32
    %1 = arith.extui %0 : i1 to i32
    %c0_i32_0 = arith.constant 0 : i32
    %2 = arith.cmpi ne, %1, %c0_i32_0 : i32
    scf.if %2 {
      %c0_71 = arith.constant 0 : index
      %c0_72 = arith.constant 0 : index
      %198 = vector.load %arg2[%c0_71, %c0_72] : memref<1x128xf32, #tpu.memory_space<vmem>>, vector<1x128xf32>
      %c0_73 = arith.constant 0 : index
      %c0_74 = arith.constant 0 : index
      %199 = vector.load %arg7[%c0_73, %c0_74] : memref<1x128xf32, #tpu.memory_space<vmem>>, vector<1x128xf32>
      tpu.vector_store %arg7[%c0_73, %c0_74], %198 {strides = array<i32>} : memref<1x128xf32, #tpu.memory_space<vmem>>, vector<1x128xf32>,
    } else {
    }
    %c0 = arith.constant 0 : index
    %c0_1 = arith.constant 0 : index
    %3 = vector.load %arg1[%c0, %c0_1] : memref<8x57xf32, #tpu.memory_space<vmem>>, vector<8x57xf32>
    %c0_2 = arith.constant 0 : index
    %c0_3 = arith.constant 0 : index
    %4 = vector.load %arg3[%c0_2, %c0_3] : memref<57x256xf32, #tpu.memory_space<vmem>>, vector<57x256xf32>
    %cst = arith.constant dense<0.000000e+00> : vector<8x256xf32>
    %5 = tpu.matmul %3, %4, %cst {dimension_numbers = #tpu.dot_dimension_numbers<[1], [0], [0], [1], [0, 0, 1, 1], [], []>} : vector<8x57xf32>, vector<57x256xf32>, vector<8x256xf32> -> vector<8x256xf32>
    %c0_4 = arith.constant 0 : index
    %c0_5 = arith.constant 0 : index
    %6 = vector.load %arg5[%c0_4, %c0_5] : memref<1x256xf32, #tpu.memory_space<vmem>>, vector<1x256xf32>
    %7 = vector.broadcast %6 : vector<1x256xf32> to vector<8x256xf32>
    %8 = arith.addf %5, %7 : vector<8x256xf32>
    %c0_6 = arith.constant 0 : index
    %c0_7 = arith.constant 0 : index
    %9 = vector.load %arg8[%c0_6, %c0_7] : memref<8x256xf32, #tpu.memory_space<vmem>>, vector<8x256xf32>
    tpu.vector_store %arg8[%c0_6, %c0_7], %8 {strides = array<i32>} : memref<8x256xf32, #tpu.memory_space<vmem>>, vector<8x256xf32>,
    %c0_8 = arith.constant 0 : index
    %c0_9 = arith.constant 0 : index
    %10 = vector.load %arg4[%c0_8, %c0_9] : memref<128x256xf32, #tpu.memory_space<vmem>>, vector<128x256xf32>
    %c8_i32 = arith.constant 8 : i32
    %11 = arith.muli %arg0, %c8_i32 : i32
    %c0_10 = arith.constant 0 : index
    %c0_11 = arith.constant 0 : index
    %12 = vector.load %arg7[%c0_10, %c0_11] : memref<1x128xf32, #tpu.memory_space<vmem>>, vector<1x128xf32>
    %c0_i32_12 = arith.constant 0 : i32
    %c1_i32 = arith.constant 1 : i32
    %13 = arith.muli %c0_i32_12, %c1_i32 : i32
    %14 = tpu.assume_multiple %13, 1 : i32
    %15 = arith.index_cast %14 : i32 to index
    %c0_13 = arith.constant 0 : index
    %16 = vector.load %arg8[%15, %c0_13] : memref<8x256xf32, #tpu.memory_space<vmem>>, vector<1x256xf32>
    %cst_14 = arith.constant dense<0.000000e+00> : vector<1x256xf32>
    %17 = tpu.matmul %12, %10, %cst_14 {dimension_numbers = #tpu.dot_dimension_numbers<[1], [0], [0], [1], [0, 0, 1, 1], [], []>} : vector<1x128xf32>, vector<128x256xf32>, vector<1x256xf32> -> vector<1x256xf32>
    %18 = arith.addf %16, %17 : vector<1x256xf32>
    %19 = vector.extract_strided_slice %18 {offsets = [0, 0], sizes = [1, 128], strides = [1, 1]} : vector<1x256xf32> to vector<1x128xf32>
    %20 = vector.extract_strided_slice %18 {offsets = [0, 128], sizes = [1, 128], strides = [1, 1]} : vector<1x256xf32> to vector<1x128xf32>
    %cst_15 = arith.constant dense<0xFF800000> : vector<1xf32>
    %21 = vector.multi_reduction <maximumf>, %20, %cst_15 [1] : vector<1x128xf32> to vector<1xf32>
    %22 = vector.shape_cast %21 : vector<1xf32> to vector<1x1xf32>
    %23 = vector.broadcast %22 : vector<1x1xf32> to vector<1x128xf32>
    %24 = arith.subf %20, %23 : vector<1x128xf32>
    %25 = math.exp %24 : vector<1x128xf32>
    %cst_16 = arith.constant dense<0.000000e+00> : vector<1xf32>
    %26 = vector.multi_reduction <add>, %25, %cst_16 [1] : vector<1x128xf32> to vector<1xf32>
    %27 = vector.shape_cast %26 : vector<1xf32> to vector<1x1xf32>
    %28 = math.log %27 : vector<1x1xf32>
    %29 = vector.broadcast %28 : vector<1x1xf32> to vector<1x128xf32>
    %30 = arith.subf %24, %29 : vector<1x128xf32>
    %31 = arith.index_cast %14 : i32 to index
    %c0_17 = arith.constant 0 : index
    %32 = vector.load %arg6[%31, %c0_17] : memref<8x128xf32, #tpu.memory_space<vmem>>, vector<1x128xf32>
    tpu.vector_store %arg6[%31, %c0_17], %30 {strides = array<i32>} : memref<8x128xf32, #tpu.memory_space<vmem>>, vector<1x128xf32>,
    %33 = arith.addi %11, %c0_i32_12 : i32
    %c17_i32 = arith.constant 17 : i32
    %34 = arith.cmpi slt, %33, %c17_i32 : i32
    %35 = arith.select %34, %19, %12 : vector<1x128xf32>
    %c1_i32_18 = arith.constant 1 : i32
    %c1_i32_19 = arith.constant 1 : i32
    %36 = arith.muli %c1_i32_18, %c1_i32_19 : i32
    %37 = tpu.assume_multiple %36, 1 : i32
    %38 = arith.index_cast %37 : i32 to index
    %c0_20 = arith.constant 0 : index
    %39 = vector.load %arg8[%38, %c0_20] : memref<8x256xf32, #tpu.memory_space<vmem>>, vector<1x256xf32>
    %cst_21 = arith.constant dense<0.000000e+00> : vector<1x256xf32>
    %40 = tpu.matmul %35, %10, %cst_21 {dimension_numbers = #tpu.dot_dimension_numbers<[1], [0], [0], [1], [0, 0, 1, 1], [], []>} : vector<1x128xf32>, vector<128x256xf32>, vector<1x256xf32> -> vector<1x256xf32>
    %41 = arith.addf %39, %40 : vector<1x256xf32>
    %42 = vector.extract_strided_slice %41 {offsets = [0, 0], sizes = [1, 128], strides = [1, 1]} : vector<1x256xf32> to vector<1x128xf32>
    %43 = vector.extract_strided_slice %41 {offsets = [0, 128], sizes = [1, 128], strides = [1, 1]} : vector<1x256xf32> to vector<1x128xf32>
    %cst_22 = arith.constant dense<0xFF800000> : vector<1xf32>
    %44 = vector.multi_reduction <maximumf>, %43, %cst_22 [1] : vector<1x128xf32> to vector<1xf32>
    %45 = vector.shape_cast %44 : vector<1xf32> to vector<1x1xf32>
    %46 = vector.broadcast %45 : vector<1x1xf32> to vector<1x128xf32>
    %47 = arith.subf %43, %46 : vector<1x128xf32>
    %48 = math.exp %47 : vector<1x128xf32>
    %cst_23 = arith.constant dense<0.000000e+00> : vector<1xf32>
    %49 = vector.multi_reduction <add>, %48, %cst_23 [1] : vector<1x128xf32> to vector<1xf32>
    %50 = vector.shape_cast %49 : vector<1xf32> to vector<1x1xf32>
    %51 = math.log %50 : vector<1x1xf32>
    %52 = vector.broadcast %51 : vector<1x1xf32> to vector<1x128xf32>
    %53 = arith.subf %47, %52 : vector<1x128xf32>
    %54 = arith.index_cast %37 : i32 to index
    %c0_24 = arith.constant 0 : index
    %55 = vector.load %arg6[%54, %c0_24] : memref<8x128xf32, #tpu.memory_space<vmem>>, vector<1x128xf32>
    tpu.vector_store %arg6[%54, %c0_24], %53 {strides = array<i32>} : memref<8x128xf32, #tpu.memory_space<vmem>>, vector<1x128xf32>,
    %56 = arith.addi %11, %c1_i32_18 : i32
    %c17_i32_25 = arith.constant 17 : i32
    %57 = arith.cmpi slt, %56, %c17_i32_25 : i32
    %58 = arith.select %57, %42, %35 : vector<1x128xf32>
    %c2_i32 = arith.constant 2 : i32
    %c1_i32_26 = arith.constant 1 : i32
    %59 = arith.muli %c2_i32, %c1_i32_26 : i32
    %60 = tpu.assume_multiple %59, 1 : i32
    %61 = arith.index_cast %60 : i32 to index
    %c0_27 = arith.constant 0 : index
    %62 = vector.load %arg8[%61, %c0_27] : memref<8x256xf32, #tpu.memory_space<vmem>>, vector<1x256xf32>
    %cst_28 = arith.constant dense<0.000000e+00> : vector<1x256xf32>
    %63 = tpu.matmul %58, %10, %cst_28 {dimension_numbers = #tpu.dot_dimension_numbers<[1], [0], [0], [1], [0, 0, 1, 1], [], []>} : vector<1x128xf32>, vector<128x256xf32>, vector<1x256xf32> -> vector<1x256xf32>
    %64 = arith.addf %62, %63 : vector<1x256xf32>
    %65 = vector.extract_strided_slice %64 {offsets = [0, 0], sizes = [1, 128], strides = [1, 1]} : vector<1x256xf32> to vector<1x128xf32>
    %66 = vector.extract_strided_slice %64 {offsets = [0, 128], sizes = [1, 128], strides = [1, 1]} : vector<1x256xf32> to vector<1x128xf32>
    %cst_29 = arith.constant dense<0xFF800000> : vector<1xf32>
    %67 = vector.multi_reduction <maximumf>, %66, %cst_29 [1] : vector<1x128xf32> to vector<1xf32>
    %68 = vector.shape_cast %67 : vector<1xf32> to vector<1x1xf32>
    %69 = vector.broadcast %68 : vector<1x1xf32> to vector<1x128xf32>
    %70 = arith.subf %66, %69 : vector<1x128xf32>
    %71 = math.exp %70 : vector<1x128xf32>
    %cst_30 = arith.constant dense<0.000000e+00> : vector<1xf32>
    %72 = vector.multi_reduction <add>, %71, %cst_30 [1] : vector<1x128xf32> to vector<1xf32>
    %73 = vector.shape_cast %72 : vector<1xf32> to vector<1x1xf32>
    %74 = math.log %73 : vector<1x1xf32>
    %75 = vector.broadcast %74 : vector<1x1xf32> to vector<1x128xf32>
    %76 = arith.subf %70, %75 : vector<1x128xf32>
    %77 = arith.index_cast %60 : i32 to index
    %c0_31 = arith.constant 0 : index
    %78 = vector.load %arg6[%77, %c0_31] : memref<8x128xf32, #tpu.memory_space<vmem>>, vector<1x128xf32>
    tpu.vector_store %arg6[%77, %c0_31], %76 {strides = array<i32>} : memref<8x128xf32, #tpu.memory_space<vmem>>, vector<1x128xf32>,
    %79 = arith.addi %11, %c2_i32 : i32
    %c17_i32_32 = arith.constant 17 : i32
    %80 = arith.cmpi slt, %79, %c17_i32_32 : i32
    %81 = arith.select %80, %65, %58 : vector<1x128xf32>
    %c3_i32 = arith.constant 3 : i32
    %c1_i32_33 = arith.constant 1 : i32
    %82 = arith.muli %c3_i32, %c1_i32_33 : i32
    %83 = tpu.assume_multiple %82, 1 : i32
    %84 = arith.index_cast %83 : i32 to index
    %c0_34 = arith.constant 0 : index
    %85 = vector.load %arg8[%84, %c0_34] : memref<8x256xf32, #tpu.memory_space<vmem>>, vector<1x256xf32>
    %cst_35 = arith.constant dense<0.000000e+00> : vector<1x256xf32>
    %86 = tpu.matmul %81, %10, %cst_35 {dimension_numbers = #tpu.dot_dimension_numbers<[1], [0], [0], [1], [0, 0, 1, 1], [], []>} : vector<1x128xf32>, vector<128x256xf32>, vector<1x256xf32> -> vector<1x256xf32>
    %87 = arith.addf %85, %86 : vector<1x256xf32>
    %88 = vector.extract_strided_slice %87 {offsets = [0, 0], sizes = [1, 128], strides = [1, 1]} : vector<1x256xf32> to vector<1x128xf32>
    %89 = vector.extract_strided_slice %87 {offsets = [0, 128], sizes = [1, 128], strides = [1, 1]} : vector<1x256xf32> to vector<1x128xf32>
    %cst_36 = arith.constant dense<0xFF800000> : vector<1xf32>
    %90 = vector.multi_reduction <maximumf>, %89, %cst_36 [1] : vector<1x128xf32> to vector<1xf32>
    %91 = vector.shape_cast %90 : vector<1xf32> to vector<1x1xf32>
    %92 = vector.broadcast %91 : vector<1x1xf32> to vector<1x128xf32>
    %93 = arith.subf %89, %92 : vector<1x128xf32>
    %94 = math.exp %93 : vector<1x128xf32>
    %cst_37 = arith.constant dense<0.000000e+00> : vector<1xf32>
    %95 = vector.multi_reduction <add>, %94, %cst_37 [1] : vector<1x128xf32> to vector<1xf32>
    %96 = vector.shape_cast %95 : vector<1xf32> to vector<1x1xf32>
    %97 = math.log %96 : vector<1x1xf32>
    %98 = vector.broadcast %97 : vector<1x1xf32> to vector<1x128xf32>
    %99 = arith.subf %93, %98 : vector<1x128xf32>
    %100 = arith.index_cast %83 : i32 to index
    %c0_38 = arith.constant 0 : index
    %101 = vector.load %arg6[%100, %c0_38] : memref<8x128xf32, #tpu.memory_space<vmem>>, vector<1x128xf32>
    tpu.vector_store %arg6[%100, %c0_38], %99 {strides = array<i32>} : memref<8x128xf32, #tpu.memory_space<vmem>>, vector<1x128xf32>,
    %102 = arith.addi %11, %c3_i32 : i32
    %c17_i32_39 = arith.constant 17 : i32
    %103 = arith.cmpi slt, %102, %c17_i32_39 : i32
    %104 = arith.select %103, %88, %81 : vector<1x128xf32>
    %c4_i32 = arith.constant 4 : i32
    %c1_i32_40 = arith.constant 1 : i32
    %105 = arith.muli %c4_i32, %c1_i32_40 : i32
    %106 = tpu.assume_multiple %105, 1 : i32
    %107 = arith.index_cast %106 : i32 to index
    %c0_41 = arith.constant 0 : index
    %108 = vector.load %arg8[%107, %c0_41] : memref<8x256xf32, #tpu.memory_space<vmem>>, vector<1x256xf32>
    %cst_42 = arith.constant dense<0.000000e+00> : vector<1x256xf32>
    %109 = tpu.matmul %104, %10, %cst_42 {dimension_numbers = #tpu.dot_dimension_numbers<[1], [0], [0], [1], [0, 0, 1, 1], [], []>} : vector<1x128xf32>, vector<128x256xf32>, vector<1x256xf32> -> vector<1x256xf32>
    %110 = arith.addf %108, %109 : vector<1x256xf32>
    %111 = vector.extract_strided_slice %110 {offsets = [0, 0], sizes = [1, 128], strides = [1, 1]} : vector<1x256xf32> to vector<1x128xf32>
    %112 = vector.extract_strided_slice %110 {offsets = [0, 128], sizes = [1, 128], strides = [1, 1]} : vector<1x256xf32> to vector<1x128xf32>
    %cst_43 = arith.constant dense<0xFF800000> : vector<1xf32>
    %113 = vector.multi_reduction <maximumf>, %112, %cst_43 [1] : vector<1x128xf32> to vector<1xf32>
    %114 = vector.shape_cast %113 : vector<1xf32> to vector<1x1xf32>
    %115 = vector.broadcast %114 : vector<1x1xf32> to vector<1x128xf32>
    %116 = arith.subf %112, %115 : vector<1x128xf32>
    %117 = math.exp %116 : vector<1x128xf32>
    %cst_44 = arith.constant dense<0.000000e+00> : vector<1xf32>
    %118 = vector.multi_reduction <add>, %117, %cst_44 [1] : vector<1x128xf32> to vector<1xf32>
    %119 = vector.shape_cast %118 : vector<1xf32> to vector<1x1xf32>
    %120 = math.log %119 : vector<1x1xf32>
    %121 = vector.broadcast %120 : vector<1x1xf32> to vector<1x128xf32>
    %122 = arith.subf %116, %121 : vector<1x128xf32>
    %123 = arith.index_cast %106 : i32 to index
    %c0_45 = arith.constant 0 : index
    %124 = vector.load %arg6[%123, %c0_45] : memref<8x128xf32, #tpu.memory_space<vmem>>, vector<1x128xf32>
    tpu.vector_store %arg6[%123, %c0_45], %122 {strides = array<i32>} : memref<8x128xf32, #tpu.memory_space<vmem>>, vector<1x128xf32>,
    %125 = arith.addi %11, %c4_i32 : i32
    %c17_i32_46 = arith.constant 17 : i32
    %126 = arith.cmpi slt, %125, %c17_i32_46 : i32
    %127 = arith.select %126, %111, %104 : vector<1x128xf32>
    %c5_i32 = arith.constant 5 : i32
    %c1_i32_47 = arith.constant 1 : i32
    %128 = arith.muli %c5_i32, %c1_i32_47 : i32
    %129 = tpu.assume_multiple %128, 1 : i32
    %130 = arith.index_cast %129 : i32 to index
    %c0_48 = arith.constant 0 : index
    %131 = vector.load %arg8[%130, %c0_48] : memref<8x256xf32, #tpu.memory_space<vmem>>, vector<1x256xf32>
    %cst_49 = arith.constant dense<0.000000e+00> : vector<1x256xf32>
    %132 = tpu.matmul %127, %10, %cst_49 {dimension_numbers = #tpu.dot_dimension_numbers<[1], [0], [0], [1], [0, 0, 1, 1], [], []>} : vector<1x128xf32>, vector<128x256xf32>, vector<1x256xf32> -> vector<1x256xf32>
    %133 = arith.addf %131, %132 : vector<1x256xf32>
    %134 = vector.extract_strided_slice %133 {offsets = [0, 0], sizes = [1, 128], strides = [1, 1]} : vector<1x256xf32> to vector<1x128xf32>
    %135 = vector.extract_strided_slice %133 {offsets = [0, 128], sizes = [1, 128], strides = [1, 1]} : vector<1x256xf32> to vector<1x128xf32>
    %cst_50 = arith.constant dense<0xFF800000> : vector<1xf32>
    %136 = vector.multi_reduction <maximumf>, %135, %cst_50 [1] : vector<1x128xf32> to vector<1xf32>
    %137 = vector.shape_cast %136 : vector<1xf32> to vector<1x1xf32>
    %138 = vector.broadcast %137 : vector<1x1xf32> to vector<1x128xf32>
    %139 = arith.subf %135, %138 : vector<1x128xf32>
    %140 = math.exp %139 : vector<1x128xf32>
    %cst_51 = arith.constant dense<0.000000e+00> : vector<1xf32>
    %141 = vector.multi_reduction <add>, %140, %cst_51 [1] : vector<1x128xf32> to vector<1xf32>
    %142 = vector.shape_cast %141 : vector<1xf32> to vector<1x1xf32>
    %143 = math.log %142 : vector<1x1xf32>
    %144 = vector.broadcast %143 : vector<1x1xf32> to vector<1x128xf32>
    %145 = arith.subf %139, %144 : vector<1x128xf32>
    %146 = arith.index_cast %129 : i32 to index
    %c0_52 = arith.constant 0 : index
    %147 = vector.load %arg6[%146, %c0_52] : memref<8x128xf32, #tpu.memory_space<vmem>>, vector<1x128xf32>
    tpu.vector_store %arg6[%146, %c0_52], %145 {strides = array<i32>} : memref<8x128xf32, #tpu.memory_space<vmem>>, vector<1x128xf32>,
    %148 = arith.addi %11, %c5_i32 : i32
    %c17_i32_53 = arith.constant 17 : i32
    %149 = arith.cmpi slt, %148, %c17_i32_53 : i32
    %150 = arith.select %149, %134, %127 : vector<1x128xf32>
    %c6_i32 = arith.constant 6 : i32
    %c1_i32_54 = arith.constant 1 : i32
    %151 = arith.muli %c6_i32, %c1_i32_54 : i32
    %152 = tpu.assume_multiple %151, 1 : i32
    %153 = arith.index_cast %152 : i32 to index
    %c0_55 = arith.constant 0 : index
    %154 = vector.load %arg8[%153, %c0_55] : memref<8x256xf32, #tpu.memory_space<vmem>>, vector<1x256xf32>
    %cst_56 = arith.constant dense<0.000000e+00> : vector<1x256xf32>
    %155 = tpu.matmul %150, %10, %cst_56 {dimension_numbers = #tpu.dot_dimension_numbers<[1], [0], [0], [1], [0, 0, 1, 1], [], []>} : vector<1x128xf32>, vector<128x256xf32>, vector<1x256xf32> -> vector<1x256xf32>
    %156 = arith.addf %154, %155 : vector<1x256xf32>
    %157 = vector.extract_strided_slice %156 {offsets = [0, 0], sizes = [1, 128], strides = [1, 1]} : vector<1x256xf32> to vector<1x128xf32>
    %158 = vector.extract_strided_slice %156 {offsets = [0, 128], sizes = [1, 128], strides = [1, 1]} : vector<1x256xf32> to vector<1x128xf32>
    %cst_57 = arith.constant dense<0xFF800000> : vector<1xf32>
    %159 = vector.multi_reduction <maximumf>, %158, %cst_57 [1] : vector<1x128xf32> to vector<1xf32>
    %160 = vector.shape_cast %159 : vector<1xf32> to vector<1x1xf32>
    %161 = vector.broadcast %160 : vector<1x1xf32> to vector<1x128xf32>
    %162 = arith.subf %158, %161 : vector<1x128xf32>
    %163 = math.exp %162 : vector<1x128xf32>
    %cst_58 = arith.constant dense<0.000000e+00> : vector<1xf32>
    %164 = vector.multi_reduction <add>, %163, %cst_58 [1] : vector<1x128xf32> to vector<1xf32>
    %165 = vector.shape_cast %164 : vector<1xf32> to vector<1x1xf32>
    %166 = math.log %165 : vector<1x1xf32>
    %167 = vector.broadcast %166 : vector<1x1xf32> to vector<1x128xf32>
    %168 = arith.subf %162, %167 : vector<1x128xf32>
    %169 = arith.index_cast %152 : i32 to index
    %c0_59 = arith.constant 0 : index
    %170 = vector.load %arg6[%169, %c0_59] : memref<8x128xf32, #tpu.memory_space<vmem>>, vector<1x128xf32>
    tpu.vector_store %arg6[%169, %c0_59], %168 {strides = array<i32>} : memref<8x128xf32, #tpu.memory_space<vmem>>, vector<1x128xf32>,
    %171 = arith.addi %11, %c6_i32 : i32
    %c17_i32_60 = arith.constant 17 : i32
    %172 = arith.cmpi slt, %171, %c17_i32_60 : i32
    %173 = arith.select %172, %157, %150 : vector<1x128xf32>
    %c7_i32 = arith.constant 7 : i32
    %c1_i32_61 = arith.constant 1 : i32
    %174 = arith.muli %c7_i32, %c1_i32_61 : i32
    %175 = tpu.assume_multiple %174, 1 : i32
    %176 = arith.index_cast %175 : i32 to index
    %c0_62 = arith.constant 0 : index
    %177 = vector.load %arg8[%176, %c0_62] : memref<8x256xf32, #tpu.memory_space<vmem>>, vector<1x256xf32>
    %cst_63 = arith.constant dense<0.000000e+00> : vector<1x256xf32>
    %178 = tpu.matmul %173, %10, %cst_63 {dimension_numbers = #tpu.dot_dimension_numbers<[1], [0], [0], [1], [0, 0, 1, 1], [], []>} : vector<1x128xf32>, vector<128x256xf32>, vector<1x256xf32> -> vector<1x256xf32>
    %179 = arith.addf %177, %178 : vector<1x256xf32>
    %180 = vector.extract_strided_slice %179 {offsets = [0, 0], sizes = [1, 128], strides = [1, 1]} : vector<1x256xf32> to vector<1x128xf32>
    %181 = vector.extract_strided_slice %179 {offsets = [0, 128], sizes = [1, 128], strides = [1, 1]} : vector<1x256xf32> to vector<1x128xf32>
    %cst_64 = arith.constant dense<0xFF800000> : vector<1xf32>
    %182 = vector.multi_reduction <maximumf>, %181, %cst_64 [1] : vector<1x128xf32> to vector<1xf32>
    %183 = vector.shape_cast %182 : vector<1xf32> to vector<1x1xf32>
    %184 = vector.broadcast %183 : vector<1x1xf32> to vector<1x128xf32>
    %185 = arith.subf %181, %184 : vector<1x128xf32>
    %186 = math.exp %185 : vector<1x128xf32>
    %cst_65 = arith.constant dense<0.000000e+00> : vector<1xf32>
    %187 = vector.multi_reduction <add>, %186, %cst_65 [1] : vector<1x128xf32> to vector<1xf32>
    %188 = vector.shape_cast %187 : vector<1xf32> to vector<1x1xf32>
    %189 = math.log %188 : vector<1x1xf32>
    %190 = vector.broadcast %189 : vector<1x1xf32> to vector<1x128xf32>
    %191 = arith.subf %185, %190 : vector<1x128xf32>
    %192 = arith.index_cast %175 : i32 to index
    %c0_66 = arith.constant 0 : index
    %193 = vector.load %arg6[%192, %c0_66] : memref<8x128xf32, #tpu.memory_space<vmem>>, vector<1x128xf32>
    tpu.vector_store %arg6[%192, %c0_66], %191 {strides = array<i32>} : memref<8x128xf32, #tpu.memory_space<vmem>>, vector<1x128xf32>,
    %194 = arith.addi %11, %c7_i32 : i32
    %c17_i32_67 = arith.constant 17 : i32
    %195 = arith.cmpi slt, %194, %c17_i32_67 : i32
    %196 = arith.select %195, %180, %173 : vector<1x128xf32>
    %c8_i32_68 = arith.constant 8 : i32
    %c0_69 = arith.constant 0 : index
    %c0_70 = arith.constant 0 : index
    %197 = vector.load %arg7[%c0_69, %c0_70] : memref<1x128xf32, #tpu.memory_space<vmem>>, vector<1x128xf32>
    tpu.vector_store %arg7[%c0_69, %c0_70], %196 {strides = array<i32>} : memref<1x128xf32, #tpu.memory_space<vmem>>, vector<1x128xf32>,
    return
  }
  func.func @transform_0(%arg0: i32) -> (i32, i32) {
    %c0_i32 = arith.constant 0 : i32
    %c0_i32_0 = arith.constant 0 : i32
    return %arg0, %c0_i32 : i32, i32
  }
  func.func @transform_1(%arg0: i32) -> (i32, i32) {
    %c0_i32 = arith.constant 0 : i32
    %c0_i32_0 = arith.constant 0 : i32
    %c0_i32_1 = arith.constant 0 : i32
    return %c0_i32, %c0_i32_0 : i32, i32
  }
  func.func @transform_2(%arg0: i32) -> (i32, i32) {
    %c0_i32 = arith.constant 0 : i32
    %c0_i32_0 = arith.constant 0 : i32
    %c0_i32_1 = arith.constant 0 : i32
    return %c0_i32, %c0_i32_0 : i32, i32
  }
  func.func @transform_3(%arg0: i32) -> (i32, i32) {
    %c0_i32 = arith.constant 0 : i32
    %c0_i32_0 = arith.constant 0 : i32
    %c0_i32_1 = arith.constant 0 : i32
    return %c0_i32, %c0_i32_0 : i32, i32
  }
  func.func @transform_4(%arg0: i32) -> (i32, i32) {
    %c0_i32 = arith.constant 0 : i32
    %c0_i32_0 = arith.constant 0 : i32
    %c0_i32_1 = arith.constant 0 : i32
    return %c0_i32, %c0_i32_0 : i32, i32
  }
  func.func @transform_5(%arg0: i32) -> (i32, i32) {
    %c0_i32 = arith.constant 0 : i32
    %c0_i32_0 = arith.constant 0 : i32
    return %arg0, %c0_i32 : i32, i32
  }
  func.func @transform_6(%arg0: i32) -> (i32, i32) {
    %c0_i32 = arith.constant 0 : i32
    %c0_i32_0 = arith.constant 0 : i32
    %c0_i32_1 = arith.constant 0 : i32
    return %c0_i32, %c0_i32_0 : i32, i32
  }
}

</mosaic_0001>

<llo_original>
// kernel: rnn_sequence.1
$region0: #{rnn_sequence.1}
  #allocation0 [shape = 'u32[]', space=smem, size = 0x4, offset = 0x4, fixed_abs, tag = 'smem constant byte address 0x4 - core index']
  #allocation1 [shape = 'u32[144,128]{1,0:T(1,128)}', space=vmem, size = 0x12000, scoped, tag = 'internal scratch']
  #allocation2 [shape = 'f32[8,256]{1,0:T(8,128)}', space=vmem, size = 0x2000, scoped, tag = 'scratch operand']
  %s0 = inlined_call_operand.vmem [shape: f32[24,57], index: 0, kind: input, shape index: {}]
  %s1 = inlined_call_operand.vmem [shape: f32[1,128], index: 1, kind: input, shape index: {}]
  %s2 = inlined_call_operand.hbm [shape: f32[57,256], index: 2, kind: input, shape index: {}]
  %s3 = inlined_call_operand.hbm [shape: f32[128,256], index: 3, kind: input, shape index: {}]
  %s4 = inlined_call_operand.vmem [shape: f32[1,256], index: 4, kind: input, shape index: {}]
  %s5 = inlined_call_operand.vmem [shape: f32[24,128], index: 5, kind: output, shape index: {0}]
  %s6 = inlined_call_operand.hbm [shape: f32[1,128], index: 6, kind: output, shape index: {1}]
  %7 = xla_tuple %s5, %s6
  %s8 = sld [smem:[#allocation0]]
  $region73: #{rnn_sequence.1} parent=0
    _
  %s10 = ssub.s32 1, %s8
  %s11 = scalar_select 0, %s10, %s8
  $region1: #{rnn_sequence.1} parent=0
    #allocation3 [shape = 'u8[65536]{0}', space=vmem, size = 0x10000, scoped, tag = 'input window, operand 2, single buffered']
    #allocation4 [shape = 's32[2]{0}', space=sflag, size = 0x8, scoped, tag = 'scoped memory for rnn_sequence.1']
    #allocation5 [shape = 's32[2]{0}', space=sflag, size = 0x8, scoped, tag = 'scoped memory for rnn_sequence.1']
    #allocation6 [shape = 'u8[131072]{0}', space=vmem, size = 0x20000, scoped, tag = 'input window, operand 3, single buffered']
    #allocation7 [shape = 's32[1]{0}', space=sflag, size = 0x4, scoped, tag = 'scoped memory for rnn_sequence.1']
    #allocation8 [shape = 'u8[512]{0}', space=vmem, size = 0x400, scoped, tag = 'output window, operand 1, single buffered']
    %12 = vsyncpa [#allocation4], 0
    %13 = vsyncpa [#allocation7], 0
    %14 = vsyncpa [#allocation5], 0
    loop: start=0, step=1, limit=5
    $region2: #{rnn_sequence.1} parent=1 // loop_pre_header
      _
    $region3: #{rnn_sequence.1} parent=1 // loop_header
      %s16 = sphi 0, %s20
      %p17 = scmp.ge.s32.totalorder %s16, 5
      %s26 = sphi 0, %s28
      %s29 = sphi 0, %s26
      %s30 = sphi 0, %s29
      %s46 = sphi 0, %s30
      %s50 = sphi 0, %s50
      %s52 = sphi 0, %s50
      %s53 = sphi 0, %s52
      %s67 = sphi 0, %s53
      %s71 = sphi 0, %s71
      %s73 = sphi 0, %s71
      %s74 = sphi 0, %s73
      %s88 = sphi 0, %s74
      %s92 = sphi 0, %s92
      %s94 = sphi 0, %s92
      %s95 = sphi 0, %s94
      %s109 = sphi 0, %s95
      %s113 = sphi 0, %s113
      %s115 = sphi 0, %s113
      %s116 = sphi 0, %s115
      %s130 = sphi 0, %s116
      %s136 = sphi 0, %s138
      %s139 = sphi 0, %s136
      %s140 = sphi 0, %s139
      %s156 = sphi 0, %s140
      %s160 = sphi 0, %s160
      %s162 = sphi 0, %s160
      %s163 = sphi 0, %s162
      %s177 = sphi 0, %s163
    $region4: #{rnn_sequence.1} parent=1 // loop_header_branch
      %19 = sbr.rel (%p17) target = $region8
    $region5: #{rnn_sequence.1} parent=1 // loop_body
      %s21 = ssub.s32 %s16, 1
      %s22 = ssub.s32 %s16, 2
      %s23 = sadd.s32 %s16, 1
      %s24 = ssub.s32 %s16, %s23
      %p25 = scmp.eq.s32.totalorder %s24, 0
      %s27 = sadd.s32 %s26, 1
      %s28 = scalar_select %p25, %s26, %s27
      %p31 = pneg %p25
      %p32 = scmp.eq.s32.totalorder %s16, 2
      %p33 = por %p31, %p32
      %p34 = scmp.ne.s32.totalorder %s26, %s29
      %p35 = scmp.eq.s32.totalorder %s16, 0
      %p36 = por %p34, %p35
      %p37 = scmp.ne.s32.totalorder %s26, %s29
      %p38 = scmp.eq.s32.totalorder %s21, 2
      %p39 = por %p37, %p38
      %p40 = scmp.ne.s32.totalorder %s29, %s30
      %p41 = scmp.eq.s32.totalorder %s21, 0
      %p42 = por %p40, %p41
      %p43 = scmp.ne.s32.totalorder %s29, %s30
      %p44 = scmp.eq.s32.totalorder %s22, 2
      %p45 = por %p43, %p44
      %p47 = scmp.ne.s32.totalorder %s30, %s46
      %p48 = scmp.eq.s32.totalorder %s22, 0
      %p49 = por %p47, %p48
      %s51 = sadd.s32 %s50, 1
      %p54 = scmp.eq.s32.totalorder %s16, 2
      %p55 = scmp.ne.s32.totalorder %s50, %s52
      %p56 = scmp.eq.s32.totalorder %s16, 0
      %p57 = por %p55, %p56
      %p58 = scmp.ne.s32.totalorder %s50, %s52
      %p59 = scmp.eq.s32.totalorder %s21, 2
      %p60 = por %p58, %p59
      %p61 = scmp.ne.s32.totalorder %s52, %s53
      %p62 = scmp.eq.s32.totalorder %s21, 0
      %p63 = por %p61, %p62
      %p64 = scmp.ne.s32.totalorder %s52, %s53
      %p65 = scmp.eq.s32.totalorder %s22, 2
      %p66 = por %p64, %p65
      %p68 = scmp.ne.s32.totalorder %s53, %s67
      %p69 = scmp.eq.s32.totalorder %s22, 0
      %p70 = por %p68, %p69
      %s72 = sadd.s32 %s71, 1
      %p75 = scmp.eq.s32.totalorder %s16, 2
      %p76 = scmp.ne.s32.totalorder %s71, %s73
      %p77 = scmp.eq.s32.totalorder %s16, 0
      %p78 = por %p76, %p77
      %p79 = scmp.ne.s32.totalorder %s71, %s73
      %p80 = scmp.eq.s32.totalorder %s21, 2
      %p81 = por %p79, %p80
      %p82 = scmp.ne.s32.totalorder %s73, %s74
      %p83 = scmp.eq.s32.totalorder %s21, 0
      %p84 = por %p82, %p83
      %p85 = scmp.ne.s32.totalorder %s73, %s74
      %p86 = scmp.eq.s32.totalorder %s22, 2
      %p87 = por %p85, %p86
      %p89 = scmp.ne.s32.totalorder %s74, %s88
      %p90 = scmp.eq.s32.totalorder %s22, 0
      %p91 = por %p89, %p90
      %s93 = sadd.s32 %s92, 1
      %p96 = scmp.eq.s32.totalorder %s16, 2
      %p97 = scmp.ne.s32.totalorder %s92, %s94
      %p98 = scmp.eq.s32.totalorder %s16, 0
      %p99 = por %p97, %p98
      %p100 = scmp.ne.s32.totalorder %s92, %s94
      %p101 = scmp.eq.s32.totalorder %s21, 2
      %p102 = por %p100, %p101
      %p103 = scmp.ne.s32.totalorder %s94, %s95
      %p104 = scmp.eq.s32.totalorder %s21, 0
      %p105 = por %p103, %p104
      %p106 = scmp.ne.s32.totalorder %s94, %s95
      %p107 = scmp.eq.s32.totalorder %s22, 2
      %p108 = por %p106, %p107
      %p110 = scmp.ne.s32.totalorder %s95, %s109
      %p111 = scmp.eq.s32.totalorder %s22, 0
      %p112 = por %p110, %p111
      %s114 = sadd.s32 %s113, 1
      %p117 = scmp.eq.s32.totalorder %s16, 2
      %p118 = scmp.ne.s32.totalorder %s113, %s115
      %p119 = scmp.eq.s32.totalorder %s16, 0
      %p120 = por %p118, %p119
      %p121 = scmp.ne.s32.totalorder %s113, %s115
      %p122 = scmp.eq.s32.totalorder %s21, 2
      %p123 = por %p121, %p122
      %p124 = scmp.ne.s32.totalorder %s115, %s116
      %p125 = scmp.eq.s32.totalorder %s21, 0
      %p126 = por %p124, %p125
      %p127 = scmp.ne.s32.totalorder %s115, %s116
      %p128 = scmp.eq.s32.totalorder %s22, 2
      %p129 = por %p127, %p128
      %p131 = scmp.ne.s32.totalorder %s116, %s130
      %p132 = scmp.eq.s32.totalorder %s22, 0
      %p133 = por %p131, %p132
      %s134 = ssub.s32 %s16, %s23
      %p135 = scmp.eq.s32.totalorder %s134, 0
      %s137 = sadd.s32 %s136, 1
      %s138 = scalar_select %p135, %s136, %s137
      %p141 = pneg %p135
      %p142 = scmp.eq.s32.totalorder %s16, 2
      %p143 = por %p141, %p142
      %p144 = scmp.ne.s32.totalorder %s136, %s139
      %p145 = scmp.eq.s32.totalorder %s16, 0
      %p146 = por %p144, %p145
      %p147 = scmp.ne.s32.totalorder %s136, %s139
      %p148 = scmp.eq.s32.totalorder %s21, 2
      %p149 = por %p147, %p148
      %p150 = scmp.ne.s32.totalorder %s139, %s140
      %p151 = scmp.eq.s32.totalorder %s21, 0
      %p152 = por %p150, %p151
      %p153 = scmp.ne.s32.totalorder %s139, %s140
      %p154 = scmp.eq.s32.totalorder %s22, 2
      %p155 = por %p153, %p154
      %p157 = scmp.ne.s32.totalorder %s140, %s156
      %p158 = scmp.eq.s32.totalorder %s22, 0
      %p159 = por %p157, %p158
      %s161 = sadd.s32 %s160, 1
      %p164 = scmp.eq.s32.totalorder %s16, 2
      %p165 = scmp.ne.s32.totalorder %s160, %s162
      %p166 = scmp.eq.s32.totalorder %s16, 0
      %p167 = por %p165, %p166
      %p168 = scmp.ne.s32.totalorder %s160, %s162
      %p169 = scmp.eq.s32.totalorder %s21, 2
      %p170 = por %p168, %p169
      %p171 = scmp.ne.s32.totalorder %s162, %s163
      %p172 = scmp.eq.s32.totalorder %s21, 0
      %p173 = por %p171, %p172
      %p174 = scmp.ne.s32.totalorder %s162, %s163
      %p175 = scmp.eq.s32.totalorder %s22, 2
      %p176 = por %p174, %p175
      %p178 = scmp.ne.s32.totalorder %s163, %s177
      %p179 = scmp.eq.s32.totalorder %s22, 0
      %p180 = por %p178, %p179
      %p181 = scmp.le.s32.totalorder 1, %s16
      %p182 = scmp.lt.s32.totalorder %s16, 4
      %p183 = pnand %p181, %p182
      %p184 = pneg %p183
      // Predicated region
      $region9: #{rnn_sequence.1} parent=5 // pred_check
        _
      $region10: #{rnn_sequence.1} parent=5 // pred_check_branch
        %186 = sbr.rel (%p183) target = $region12
      $region11: #{rnn_sequence.1} parent=5 // pred_region
        %s187 = ssub.s32 %s16, 1
        // Predicated region
        $region13: #{rnn_sequence.1} parent=11 // pred_check
          %p188 = pneg %p63
        $region14: #{rnn_sequence.1} parent=11 // pred_check_branch
          %190 = sbr.rel (%p188) target = $region16
        $region15: #{rnn_sequence.1} parent=11 // pred_region
          _
        $region16: #{rnn_sequence.1} parent=11 // pred_fallthru
          _
        // Predicated region
        $region17: #{rnn_sequence.1} parent=11 // pred_check
          %p191 = pneg %p84
        $region18: #{rnn_sequence.1} parent=11 // pred_check_branch
          %193 = sbr.rel (%p191) target = $region20
        $region19: #{rnn_sequence.1} parent=11 // pred_region
          %s195 = ssub.s32 2048, 2048
          %196 = vsyncadd [#allocation4], %s195
          %s197 = sshll.u32 [#allocation3], 4
          %s198 = int_to_ptr.vmem [resolvable:$true] %s197
          %203 = dma.hbm_to_vmem [thread:$0]  %s2, 2048, %s198, [#allocation4], 256, 256, 16
        $region20: #{rnn_sequence.1} parent=11 // pred_fallthru
          _
        // Predicated region
        $region21: #{rnn_sequence.1} parent=11 // pred_check
          %p204 = pneg %p105
        $region22: #{rnn_sequence.1} parent=11 // pred_check_branch
          %206 = sbr.rel (%p204) target = $region24
        $region23: #{rnn_sequence.1} parent=11 // pred_region
          %s208 = ssub.s32 4096, 4096
          %209 = vsyncadd [#allocation7], %s208
          %s210 = sshll.u32 [#allocation6], 4
          %s211 = int_to_ptr.vmem [resolvable:$true] %s210
          %216 = dma.hbm_to_vmem [thread:$0]  %s3, 4096, %s211, [#allocation7], 256, 256, 16
        $region24: #{rnn_sequence.1} parent=11 // pred_fallthru
          _
        // Predicated region
        $region25: #{rnn_sequence.1} parent=11 // pred_check
          %p217 = pneg %p126
        $region26: #{rnn_sequence.1} parent=11 // pred_check_branch
          %219 = sbr.rel (%p217) target = $region28
        $region27: #{rnn_sequence.1} parent=11 // pred_region
          _
        $region28: #{rnn_sequence.1} parent=11 // pred_fallthru
          _
      $region12: #{rnn_sequence.1} parent=5 // pred_fallthru
        _
      %p220 = scmp.lt.s32.totalorder %s16, 3
      // Predicated region
      $region29: #{rnn_sequence.1} parent=5 // pred_check
        %p221 = pneg %p220
      $region30: #{rnn_sequence.1} parent=5 // pred_check_branch
        %223 = sbr.rel (%p221) target = $region32
      $region31: #{rnn_sequence.1} parent=5 // pred_region
        // Predicated region
        $region33: #{rnn_sequence.1} parent=31 // pred_check
          %p224 = pneg %p36
        $region34: #{rnn_sequence.1} parent=31 // pred_check_branch
          %226 = sbr.rel (%p224) target = $region36
        $region35: #{rnn_sequence.1} parent=31 // pred_region
          %p227 = scmp.lt.s32.totalorder %s16, 2
          %s228 = scalar_select %p227, %s16, 2
          %s229 = smul.addr %s228, 8
          %s230 = scalar_lea.vmem %s0, %s229
        $region36: #{rnn_sequence.1} parent=31 // pred_fallthru
          _
      $region32: #{rnn_sequence.1} parent=5 // pred_fallthru
        _
      %p231 = scmp.le.s32.totalorder 1, %s16
      %p232 = scmp.lt.s32.totalorder %s16, 4
      %p233 = pnand %p231, %p232
      %p234 = pneg %p233
      // Predicated region
      $region37: #{rnn_sequence.1} parent=5 // pred_check
        _
      $region38: #{rnn_sequence.1} parent=5 // pred_check_branch
        %236 = sbr.rel (%p233) target = $region40
      $region39: #{rnn_sequence.1} parent=5 // pred_region
        %s237 = ssub.s32 %s16, 1
        // Predicated region
        $region41: #{rnn_sequence.1} parent=39 // pred_check
          %p238 = pneg %p84
        $region42: #{rnn_sequence.1} parent=39 // pred_check_branch
          %240 = sbr.rel (%p238) target = $region44
        $region43: #{rnn_sequence.1} parent=39 // pred_region
          %241 = dma.done [#allocation4], 2048
        $region44: #{rnn_sequence.1} parent=39 // pred_fallthru
          _
        // Predicated region
        $region45: #{rnn_sequence.1} parent=39 // pred_check
          %p242 = pneg %p105
        $region46: #{rnn_sequence.1} parent=39 // pred_check_branch
          %244 = sbr.rel (%p242) target = $region48
        $region47: #{rnn_sequence.1} parent=39 // pred_region
          %245 = dma.done [#allocation7], 4096
        $region48: #{rnn_sequence.1} parent=39 // pred_fallthru
          _
        %p246 = scmp.lt.s32.totalorder %s21, 2
        %s247 = scalar_select %p246, %s21, 2
        %s248 = smul.addr %s247, 8
        %s249 = scalar_lea.vmem %s0, %s248
        %p250 = pneg %p42
        %p251 = pneg %p39
        %p252 = pneg %p63
        %p253 = pneg %p60
        %p254 = pneg %p84
        %p255 = pneg %p81
        %p256 = pneg %p105
        %p257 = pneg %p102
        %p258 = pneg %p126
        %p259 = pneg %p123
        %p260 = pneg %p152
        %p261 = pneg %p149
        %p262 = scmp.lt.s32.totalorder %s21, 2
        %s263 = scalar_select %p262, %s21, 2
        %s264 = smul.addr %s263, 8
        %s265 = scalar_lea.vmem %s5, %s264
        %p266 = pneg %p173
        %p267 = pneg %p170
        %p268 = scmp.lt.s32.totalorder %s21, 2
        %s269 = scalar_select %p268, %s21, 2
        %s270 = smul.addr %s269, 8
        %s271 = scalar_lea.vmem %s0, %s270
        %p272 = scmp.lt.s32.totalorder %s21, 2
        %s273 = scalar_select %p272, %s21, 2
        %s274 = smul.addr %s273, 8
        %s275 = scalar_lea.vmem %s5, %s274
        %p276 = scmp.eq.s32.totalorder %s21, 0
        // Predicated region
        $region49: #{rnn_sequence.1} parent=39 // pred_check
          %p277 = pneg %p276
        $region50: #{rnn_sequence.1} parent=39 // pred_check_branch
          %279 = sbr.rel (%p277) target = $region52
        $region51: #{rnn_sequence.1} parent=39 // pred_region
          %v280 = vld [vmem:[%s1] sm:$0x1]
          %281 = vst [vmem:[#allocation8] sm:$0x1] %v280
        $region52: #{rnn_sequence.1} parent=39 // pred_fallthru
          _
        %v282 = vld [vmem:[%s271] sm:$0xff]
        %v283 = vld [vmem:[#allocation3] sm:$0xff]
        %v284 = vld [vmem:[#allocation3 + $0x8] sm:$0xff]
        %v285 = vld [vmem:[#allocation3 + $0x10] sm:$0xff]
        %v286 = vld [vmem:[#allocation3 + $0x18] sm:$0xff]
        %v287 = vld [vmem:[#allocation3 + $0x20] sm:$0xff]
        %v288 = vld [vmem:[#allocation3 + $0x28] sm:$0xff]
        %v289 = vld [vmem:[#allocation3 + $0x30] sm:$0xff]
        %v290 = vld [vmem:[#allocation3 + $0x38] sm:$0xff]
        %v291 = vld [vmem:[#allocation3 + $0x40] sm:$0xff]
        %v292 = vld [vmem:[#allocation3 + $0x48] sm:$0xff]
        %v293 = vld [vmem:[#allocation3 + $0x50] sm:$0xff]
        %v294 = vld [vmem:[#allocation3 + $0x58] sm:$0xff]
        %v295 = vld [vmem:[#allocation3 + $0x60] sm:$0xff]
        %v296 = vld [vmem:[#allocation3 + $0x68] sm:$0xff]
        %v297 = vld [vmem:[#allocation3 + $0x70] sm:$0x1]
        %v298 = vld [vmem:[#allocation3 + $0x78] sm:$0x1]
        %v299 = vld [vmem:[%s4] sm:$0x3]
        %v301 = vlaneseq
        %v302 = vshrl.u32 %v301, 7
        %v303 = vsub.s32 0, %v302
        %v304 = vrot.slane %v299, %v303
        %v305 = vlaneseq
        %v306 = vshrl.u32 %v305, 7
        %v307 = vsub.s32 1, %v306
        %v308 = vrot.slane %v299, %v307
        %vm311 = vcmask 465920
        %v313 = vsel %vm311, %v282, 0
        %vm315 = vcmask 1040384
        %v317 = vsel %vm315, %v297, 0
        %v320 = vsel %vm315, %v298, 0
        %322 = vmatprep.subr.mxu0 %v284
        %323 = vmatpush1.msra.mxu0 %v283
        %324 = vmatprep.subr.mxu0 %v286
        %325 = vmatpush1.msra.mxu0 %v285
        %326 = vmatprep.subr.mxu0 %v288
        %327 = vmatpush1.msra.mxu0 %v287
        %328 = vmatprep.subr.mxu0 %v290
        %329 = vmatpush1.msra.mxu0 %v289
        %330 = vmatprep.subr.mxu0 %v292
        %331 = vmatpush1.msra.mxu0 %v291
        %332 = vmatprep.subr.mxu0 %v294
        %333 = vmatpush1.msra.mxu0 %v293
        %334 = vmatprep.subr.mxu0 %v296
        %335 = vmatpush1.msra.mxu0 %v295
        %336 = vmatprep.subr.mxu0 %v320
        %337 = vmatpush1.msra.mxu0 %v317
        %338 = vmatprep.subr.mxu0 0.0
        %339 = vmatpush1.msra.mxu0 0.0
        %340 = vmatprep.subr.mxu0 0.0
        %341 = vmatpush1.msra.mxu0 0.0
        %342 = vmatprep.subr.mxu0 0.0
        %343 = vmatpush1.msra.mxu0 0.0
        %344 = vmatprep.subr.mxu0 0.0
        %345 = vmatpush1.msra.mxu0 0.0
        %346 = vmatprep.subr.mxu0 0.0
        %347 = vmatpush1.msra.mxu0 0.0
        %348 = vmatprep.subr.mxu0 0.0
        %349 = vmatpush1.msra.mxu0 0.0
        %350 = vmatprep.subr.mxu0 0.0
        %351 = vmatpush1.msra.mxu0 0.0
        %352 = vmatprep.subr.mxu0 0.0
        %353 = vmatpush1.msra.mxu0 0.0
        %354 = vmatprep.subr.mxu0 0.0
        %355 = vmatpush1.msra.mxu0 0.0
        %356 = vmatprep.subr.mxu0 0.0
        %357 = vmatpush1.msra.mxu0 0.0
        %358 = vmatprep.subr.mxu0 0.0
        %359 = vmatpush1.msra.mxu0 0.0
        %360 = vmatprep.subr.mxu0 0.0
        %361 = vmatpush1.msra.mxu0 0.0
        %362 = vmatprep.subr.mxu0 0.0
        %363 = vmatpush1.msra.mxu0 0.0
        %364 = vmatprep.subr.mxu0 0.0
        %365 = vmatpush1.msra.mxu0 0.0
        %366 = vmatprep.subr.mxu0 0.0
        %367 = vmatpush1.msra.mxu0 0.0
        %368 = vmatprep.subr.mxu0 0.0
        %369 = vmatpush1.msra.mxu0 0.0
        %370 = vmatprep.subr.mxu0 0.0
        %371 = vmatpush1.msra.mxu0 0.0
        %372 = vmatprep.subr.mxu0 0.0
        %373 = vmatpush1.msra.mxu0 0.0
        %374 = vmatprep.subr.mxu0 0.0
        %375 = vmatpush1.msra.mxu0 0.0
        %376 = vmatprep.subr.mxu0 0.0
        %377 = vmatpush1.msra.mxu0 0.0
        %378 = vmatprep.subr.mxu0 0.0
        %379 = vmatpush1.msra.mxu0 0.0
        %380 = vmatprep.subr.mxu0 0.0
        %381 = vmatpush1.msra.mxu0 0.0
        %382 = vmatprep.subr.mxu0 0.0
        %383 = vmatpush1.msra.mxu0 0.0
        %384 = vmatprep.subr.mxu0 0.0
        %385 = vmatpush1.msra.mxu0 0.0
        %386 = vmatprep.mubr.f32.mxu0 0.0
        %387 = vmatmul.mubr.f32.gmra.mrb[0].mxu0 %v313
        %v388 = vpop.f32.mrb[0].mxu0
        %v389 = vadd.f32 %v304, %v388
        %v390 = vpop.f32.mrb[0].mxu0
        %v391 = vadd.f32 %v308, %v390
        %392 = vdwg.mxu0
        %393 = vst [vmem:[#allocation2] sm:$0xff] %v389
        %394 = vst [vmem:[#allocation2 + $0x8] sm:$0xff] %v391
        %v395 = vld [vmem:[#allocation6] sm:$0xff]
        %v396 = vld [vmem:[#allocation6 + $0x8] sm:$0xff]
        %v397 = vld [vmem:[#allocation6 + $0x10] sm:$0xff]
        %v398 = vld [vmem:[#allocation6 + $0x18] sm:$0xff]
        %v399 = vld [vmem:[#allocation6 + $0x20] sm:$0xff]
        %v400 = vld [vmem:[#allocation6 + $0x28] sm:$0xff]
        %v401 = vld [vmem:[#allocation6 + $0x30] sm:$0xff]
        %v402 = vld [vmem:[#allocation6 + $0x38] sm:$0xff]
        %v403 = vld [vmem:[#allocation6 + $0x40] sm:$0xff]
        %v404 = vld [vmem:[#allocation6 + $0x48] sm:$0xff]
        %v405 = vld [vmem:[#allocation6 + $0x50] sm:$0xff]
        %v406 = vld [vmem:[#allocation6 + $0x58] sm:$0xff]
        %v407 = vld [vmem:[#allocation6 + $0x60] sm:$0xff]
        %v408 = vld [vmem:[#allocation6 + $0x68] sm:$0xff]
        %v409 = vld [vmem:[#allocation6 + $0x70] sm:$0xff]
        %v410 = vld [vmem:[#allocation6 + $0x78] sm:$0xff]
        %v411 = vld [vmem:[#allocation6 + $0x80] sm:$0xff]
        %v412 = vld [vmem:[#allocation6 + $0x88] sm:$0xff]
        %v413 = vld [vmem:[#allocation6 + $0x90] sm:$0xff]
        %v414 = vld [vmem:[#allocation6 + $0x98] sm:$0xff]
        %v415 = vld [vmem:[#allocation6 + $0xa0] sm:$0xff]
        %v416 = vld [vmem:[#allocation6 + $0xa8] sm:$0xff]
        %v417 = vld [vmem:[#allocation6 + $0xb0] sm:$0xff]
        %v418 = vld [vmem:[#allocation6 + $0xb8] sm:$0xff]
        %v419 = vld [vmem:[#allocation6 + $0xc0] sm:$0xff]
        %v420 = vld [vmem:[#allocation6 + $0xc8] sm:$0xff]
        %v421 = vld [vmem:[#allocation6 + $0xd0] sm:$0xff]
        %v422 = vld [vmem:[#allocation6 + $0xd8] sm:$0xff]
        %v423 = vld [vmem:[#allocation6 + $0xe0] sm:$0xff]
        %v424 = vld [vmem:[#allocation6 + $0xe8] sm:$0xff]
        %v425 = vld [vmem:[#allocation6 + $0xf0] sm:$0xff]
        %v426 = vld [vmem:[#allocation6 + $0xf8] sm:$0xff]
        %s427 = smul.u32 %s21, 8
        %v428 = vld [vmem:[#allocation8] sm:$0x1]
        %s429 = smul.u32 0, 2
        %s430 = smul.u32 %s429, 8
        %s431 = sadd.s32 %s430, 0
        %s432 = scalar_lea.vmem [#allocation2], %s431
        %v433 = vld [vmem:[%s432] ss:$8 sm:$0x3]
        %434 = vmatprep.subr.mxu0 %v396
        %435 = vmatpush1.msra.mxu0 %v395
        %436 = vmatprep.subr.mxu0 %v398
        %437 = vmatpush1.msra.mxu0 %v397
        %438 = vmatprep.subr.mxu0 %v400
        %439 = vmatpush1.msra.mxu0 %v399
        %440 = vmatprep.subr.mxu0 %v402
        %441 = vmatpush1.msra.mxu0 %v401
        %442 = vmatprep.subr.mxu0 %v404
        %443 = vmatpush1.msra.mxu0 %v403
        %444 = vmatprep.subr.mxu0 %v406
        %445 = vmatpush1.msra.mxu0 %v405
        %446 = vmatprep.subr.mxu0 %v408
        %447 = vmatpush1.msra.mxu0 %v407
        %448 = vmatprep.subr.mxu0 %v410
        %449 = vmatpush1.msra.mxu0 %v409
        %450 = vmatprep.subr.mxu0 %v412
        %451 = vmatpush1.msra.mxu0 %v411
        %452 = vmatprep.subr.mxu0 %v414
        %453 = vmatpush1.msra.mxu0 %v413
        %454 = vmatprep.subr.mxu0 %v416
        %455 = vmatpush1.msra.mxu0 %v415
        %456 = vmatprep.subr.mxu0 %v418
        %457 = vmatpush1.msra.mxu0 %v417
        %458 = vmatprep.subr.mxu0 %v420
        %459 = vmatpush1.msra.mxu0 %v419
        %460 = vmatprep.subr.mxu0 %v422
        %461 = vmatpush1.msra.mxu0 %v421
        %462 = vmatprep.subr.mxu0 %v424
        %463 = vmatpush1.msra.mxu0 %v423
        %464 = vmatprep.subr.mxu0 %v426
        %465 = vmatpush1.msra.mxu0 %v425
        %466 = vmatprep.subr.mxu0 0.0
        %467 = vmatpush1.msra.mxu0 0.0
        %468 = vmatprep.subr.mxu0 0.0
        %469 = vmatpush1.msra.mxu0 0.0
        %470 = vmatprep.subr.mxu0 0.0
        %471 = vmatpush1.msra.mxu0 0.0
        %472 = vmatprep.subr.mxu0 0.0
        %473 = vmatpush1.msra.mxu0 0.0
        %474 = vmatprep.subr.mxu0 0.0
        %475 = vmatpush1.msra.mxu0 0.0
        %476 = vmatprep.subr.mxu0 0.0
        %477 = vmatpush1.msra.mxu0 0.0
        %478 = vmatprep.subr.mxu0 0.0
        %479 = vmatpush1.msra.mxu0 0.0
        %480 = vmatprep.subr.mxu0 0.0
        %481 = vmatpush1.msra.mxu0 0.0
        %482 = vmatprep.subr.mxu0 0.0
        %483 = vmatpush1.msra.mxu0 0.0
        %484 = vmatprep.subr.mxu0 0.0
        %485 = vmatpush1.msra.mxu0 0.0
        %486 = vmatprep.subr.mxu0 0.0
        %487 = vmatpush1.msra.mxu0 0.0
        %488 = vmatprep.subr.mxu0 0.0
        %489 = vmatpush1.msra.mxu0 0.0
        %490 = vmatprep.subr.mxu0 0.0
        %491 = vmatpush1.msra.mxu0 0.0
        %492 = vmatprep.subr.mxu0 0.0
        %493 = vmatpush1.msra.mxu0 0.0
        %494 = vmatprep.subr.mxu0 0.0
        %495 = vmatpush1.msra.mxu0 0.0
        %496 = vmatprep.subr.mxu0 0.0
        %497 = vmatpush1.msra.mxu0 0.0
        %498 = vmatprep.mubr.f32.mxu0 0.0
        %499 = vmatmul.mubr.f32.gmra.mrb[0].mxu0 %v428
        %v500 = vpop.f32.mrb[0].mxu0
        %v501 = vadd.f32 0.0, %v500
        %v502 = vpop.f32.mrb[0].mxu0
        %v503 = vadd.f32 0.0, %v502
        %504 = vdwg.mxu0
        %v507 = vcombine.low %v501, %v503
        %v509 = vunpack.c.l.s4 1966171168
        %v510 = vunpack.c.0.s8 %v509
        %v511 = vlaneseq
        %v512 = vshrl.u32 %v511, 7
        %v513 = vsub.s32 %v510, %v512
        %v514 = vrot.slane %v507, %v513
        %v516 = vunpack.c.l.s4 1966171168
        %v517 = vunpack.c.0.s8 %v516
        %v518 = vlaneseq
        %v519 = vshrl.u32 %v518, 7
        %v520 = vsub.s32 %v517, %v519
        %v521 = vrot.slane %v514, %v520
        %v523 = vadd.f32 %v433, %v521
        %v525 = vlaneseq
        %v526 = vshrl.u32 %v525, 7
        %v527 = vsub.s32 1, %v526
        %v528 = vrot.slane %v523, %v527
        %v530 = vsel %vm315, %v528, -inf
        %531 = vmax.xlane.f32.xlu0 %v530
        %v532 = vpop.xlane.xlu0 %531
        %v533 = vrot.slane %v523, 1
        %v535 = vsub.f32 %v533, %v532
        %v536 = vmul.f32 %v535, 1.442695
        %v537 = vpow.pop %v536
        %v538 = vsel %vm315, %v537, 0.0
        %539 = vadd.xlane.f32.xlu0 %v538
        %v540 = vpop.xlane.xlu0 %539
        %v541 = vlog2.pop %v540
        %v542 = vmul.f32 %v541, 0.6931472
        %v543 = vsub.f32 %v535, %v542
        %544 = vst [vmem:[%s275] sm:$0x1] %v543
        %p545 = scmp.lt.s32.totalorder %s427, 17
        %s546 = scalar_select %p545, 1, 0
        %v547 = vstv %s546
        %vm548 = vcmp.eq.s32.totalorder %v547, 1
        %v549 = vsel %vm548, %v523, %v428
        %s550 = smul.u32 0, 2
        %s551 = smul.u32 %s550, 8
        %s552 = sadd.s32 %s551, 1
        %s553 = scalar_lea.vmem [#allocation2], %s552
        %v554 = vld [vmem:[%s553] ss:$8 sm:$0x3]
        %555 = vmatprep.subr.mxu0 %v396
        %556 = vmatpush1.msra.mxu0 %v395
        %557 = vmatprep.subr.mxu0 %v398
        %558 = vmatpush1.msra.mxu0 %v397
        %559 = vmatprep.subr.mxu0 %v400
        %560 = vmatpush1.msra.mxu0 %v399
        %561 = vmatprep.subr.mxu0 %v402
        %562 = vmatpush1.msra.mxu0 %v401
        %563 = vmatprep.subr.mxu0 %v404
        %564 = vmatpush1.msra.mxu0 %v403
        %565 = vmatprep.subr.mxu0 %v406
        %566 = vmatpush1.msra.mxu0 %v405
        %567 = vmatprep.subr.mxu0 %v408
        %568 = vmatpush1.msra.mxu0 %v407
        %569 = vmatprep.subr.mxu0 %v410
        %570 = vmatpush1.msra.mxu0 %v409
        %571 = vmatprep.subr.mxu0 %v412
        %572 = vmatpush1.msra.mxu0 %v411
        %573 = vmatprep.subr.mxu0 %v414
        %574 = vmatpush1.msra.mxu0 %v413
        %575 = vmatprep.subr.mxu0 %v416
        %576 = vmatpush1.msra.mxu0 %v415
        %577 = vmatprep.subr.mxu0 %v418
        %578 = vmatpush1.msra.mxu0 %v417
        %579 = vmatprep.subr.mxu0 %v420
        %580 = vmatpush1.msra.mxu0 %v419
        %581 = vmatprep.subr.mxu0 %v422
        %582 = vmatpush1.msra.mxu0 %v421
        %583 = vmatprep.subr.mxu0 %v424
        %584 = vmatpush1.msra.mxu0 %v423
        %585 = vmatprep.subr.mxu0 %v426
        %586 = vmatpush1.msra.mxu0 %v425
        %587 = vmatprep.subr.mxu0 0.0
        %588 = vmatpush1.msra.mxu0 0.0
        %589 = vmatprep.subr.mxu0 0.0
        %590 = vmatpush1.msra.mxu0 0.0
        %591 = vmatprep.subr.mxu0 0.0
        %592 = vmatpush1.msra.mxu0 0.0
        %593 = vmatprep.subr.mxu0 0.0
        %594 = vmatpush1.msra.mxu0 0.0
        %595 = vmatprep.subr.mxu0 0.0
        %596 = vmatpush1.msra.mxu0 0.0
        %597 = vmatprep.subr.mxu0 0.0
        %598 = vmatpush1.msra.mxu0 0.0
        %599 = vmatprep.subr.mxu0 0.0
        %600 = vmatpush1.msra.mxu0 0.0
        %601 = vmatprep.subr.mxu0 0.0
        %602 = vmatpush1.msra.mxu0 0.0
        %603 = vmatprep.subr.mxu0 0.0
        %604 = vmatpush1.msra.mxu0 0.0
        %605 = vmatprep.subr.mxu0 0.0
        %606 = vmatpush1.msra.mxu0 0.0
        %607 = vmatprep.subr.mxu0 0.0
        %608 = vmatpush1.msra.mxu0 0.0
        %609 = vmatprep.subr.mxu0 0.0
        %610 = vmatpush1.msra.mxu0 0.0
        %611 = vmatprep.subr.mxu0 0.0
        %612 = vmatpush1.msra.mxu0 0.0
        %613 = vmatprep.subr.mxu0 0.0
        %614 = vmatpush1.msra.mxu0 0.0
        %615 = vmatprep.subr.mxu0 0.0
        %616 = vmatpush1.msra.mxu0 0.0
        %617 = vmatprep.subr.mxu0 0.0
        %618 = vmatpush1.msra.mxu0 0.0
        %619 = vmatprep.mubr.f32.mxu0 0.0
        %620 = vmatmul.mubr.f32.gmra.mrb[0].mxu0 %v549
        %v621 = vpop.f32.mrb[0].mxu0
        %v622 = vadd.f32 0.0, %v621
        %v623 = vpop.f32.mrb[0].mxu0
        %v624 = vadd.f32 0.0, %v623
        %625 = vdwg.mxu0
        %v628 = vcombine.low %v622, %v624
        %v630 = vunpack.c.l.s4 1966171168
        %v631 = vunpack.c.0.s8 %v630
        %v632 = vlaneseq
        %v633 = vshrl.u32 %v632, 7
        %v634 = vsub.s32 %v631, %v633
        %v635 = vrot.slane %v628, %v634
        %v637 = vunpack.c.l.s4 1966171168
        %v638 = vunpack.c.0.s8 %v637
        %v639 = vlaneseq
        %v640 = vshrl.u32 %v639, 7
        %v641 = vsub.s32 %v638, %v640
        %v642 = vrot.slane %v635, %v641
        %v644 = vadd.f32 %v554, %v642
        %v646 = vlaneseq
        %v647 = vshrl.u32 %v646, 7
        %v648 = vsub.s32 1, %v647
        %v649 = vrot.slane %v644, %v648
        %v651 = vsel %vm315, %v649, -inf
        %652 = vmax.xlane.f32.xlu0 %v651
        %v653 = vpop.xlane.xlu0 %652
        %v654 = vrot.slane %v644, 1
        %v656 = vsub.f32 %v654, %v653
        %v657 = vmul.f32 %v656, 1.442695
        %v658 = vpow.pop %v657
        %v659 = vsel %vm315, %v658, 0.0
        %660 = vadd.xlane.f32.xlu0 %v659
        %v661 = vpop.xlane.xlu0 %660
        %v662 = vlog2.pop %v661
        %v663 = vmul.f32 %v662, 0.6931472
        %v664 = vsub.f32 %v656, %v663
        %s665 = scalar_lea.vmem %s275, 1
        %666 = vst [vmem:[%s665] sm:$0x1] %v664
        %s667 = sadd.s32 %s427, 1
        %p668 = scmp.lt.s32.totalorder %s667, 17
        %s669 = scalar_select %p668, 1, 0
        %v670 = vstv %s669
        %vm671 = vcmp.eq.s32.totalorder %v670, 1
        %v672 = vsel %vm671, %v644, %v549
        %s673 = smul.u32 0, 2
        %s674 = smul.u32 %s673, 8
        %s675 = sadd.s32 %s674, 2
        %s676 = scalar_lea.vmem [#allocation2], %s675
        %v677 = vld [vmem:[%s676] ss:$8 sm:$0x3]
        %678 = vmatprep.subr.mxu0 %v396
        %679 = vmatpush1.msra.mxu0 %v395
        %680 = vmatprep.subr.mxu0 %v398
        %681 = vmatpush1.msra.mxu0 %v397
        %682 = vmatprep.subr.mxu0 %v400
        %683 = vmatpush1.msra.mxu0 %v399
        %684 = vmatprep.subr.mxu0 %v402
        %685 = vmatpush1.msra.mxu0 %v401
        %686 = vmatprep.subr.mxu0 %v404
        %687 = vmatpush1.msra.mxu0 %v403
        %688 = vmatprep.subr.mxu0 %v406
        %689 = vmatpush1.msra.mxu0 %v405
        %690 = vmatprep.subr.mxu0 %v408
        %691 = vmatpush1.msra.mxu0 %v407
        %692 = vmatprep.subr.mxu0 %v410
        %693 = vmatpush1.msra.mxu0 %v409
        %694 = vmatprep.subr.mxu0 %v412
        %695 = vmatpush1.msra.mxu0 %v411
        %696 = vmatprep.subr.mxu0 %v414
        %697 = vmatpush1.msra.mxu0 %v413
        %698 = vmatprep.subr.mxu0 %v416
        %699 = vmatpush1.msra.mxu0 %v415
        %700 = vmatprep.subr.mxu0 %v418
        %701 = vmatpush1.msra.mxu0 %v417
        %702 = vmatprep.subr.mxu0 %v420
        %703 = vmatpush1.msra.mxu0 %v419
        %704 = vmatprep.subr.mxu0 %v422
        %705 = vmatpush1.msra.mxu0 %v421
        %706 = vmatprep.subr.mxu0 %v424
        %707 = vmatpush1.msra.mxu0 %v423
        %708 = vmatprep.subr.mxu0 %v426
        %709 = vmatpush1.msra.mxu0 %v425
        %710 = vmatprep.subr.mxu0 0.0
        %711 = vmatpush1.msra.mxu0 0.0
        %712 = vmatprep.subr.mxu0 0.0
        %713 = vmatpush1.msra.mxu0 0.0
        %714 = vmatprep.subr.mxu0 0.0
        %715 = vmatpush1.msra.mxu0 0.0
        %716 = vmatprep.subr.mxu0 0.0
        %717 = vmatpush1.msra.mxu0 0.0
        %718 = vmatprep.subr.mxu0 0.0
        %719 = vmatpush1.msra.mxu0 0.0
        %720 = vmatprep.subr.mxu0 0.0
        %721 = vmatpush1.msra.mxu0 0.0
        %722 = vmatprep.subr.mxu0 0.0
        %723 = vmatpush1.msra.mxu0 0.0
        %724 = vmatprep.subr.mxu0 0.0
        %725 = vmatpush1.msra.mxu0 0.0
        %726 = vmatprep.subr.mxu0 0.0
        %727 = vmatpush1.msra.mxu0 0.0
        %728 = vmatprep.subr.mxu0 0.0
        %729 = vmatpush1.msra.mxu0 0.0
        %730 = vmatprep.subr.mxu0 0.0
        %731 = vmatpush1.msra.mxu0 0.0
        %732 = vmatprep.subr.mxu0 0.0
        %733 = vmatpush1.msra.mxu0 0.0
        %734 = vmatprep.subr.mxu0 0.0
        %735 = vmatpush1.msra.mxu0 0.0
        %736 = vmatprep.subr.mxu0 0.0
        %737 = vmatpush1.msra.mxu0 0.0
        %738 = vmatprep.subr.mxu0 0.0
        %739 = vmatpush1.msra.mxu0 0.0
        %740 = vmatprep.subr.mxu0 0.0
        %741 = vmatpush1.msra.mxu0 0.0
        %742 = vmatprep.mubr.f32.mxu0 0.0
        %743 = vmatmul.mubr.f32.gmra.mrb[0].mxu0 %v672
        %v744 = vpop.f32.mrb[0].mxu0
        %v745 = vadd.f32 0.0, %v744
        %v746 = vpop.f32.mrb[0].mxu0
        %v747 = vadd.f32 0.0, %v746
        %748 = vdwg.mxu0
        %v751 = vcombine.low %v745, %v747
        %v753 = vunpack.c.l.s4 1966171168
        %v754 = vunpack.c.0.s8 %v753
        %v755 = vlaneseq
        %v756 = vshrl.u32 %v755, 7
        %v757 = vsub.s32 %v754, %v756
        %v758 = vrot.slane %v751, %v757
        %v760 = vunpack.c.l.s4 1966171168
        %v761 = vunpack.c.0.s8 %v760
        %v762 = vlaneseq
        %v763 = vshrl.u32 %v762, 7
        %v764 = vsub.s32 %v761, %v763
        %v765 = vrot.slane %v758, %v764
        %v767 = vadd.f32 %v677, %v765
        %v769 = vlaneseq
        %v770 = vshrl.u32 %v769, 7
        %v771 = vsub.s32 1, %v770
        %v772 = vrot.slane %v767, %v771
        %v774 = vsel %vm315, %v772, -inf
        %775 = vmax.xlane.f32.xlu0 %v774
        %v776 = vpop.xlane.xlu0 %775
        %v777 = vrot.slane %v767, 1
        %v779 = vsub.f32 %v777, %v776
        %v780 = vmul.f32 %v779, 1.442695
        %v781 = vpow.pop %v780
        %v782 = vsel %vm315, %v781, 0.0
        %783 = vadd.xlane.f32.xlu0 %v782
        %v784 = vpop.xlane.xlu0 %783
        %v785 = vlog2.pop %v784
        %v786 = vmul.f32 %v785, 0.6931472
        %v787 = vsub.f32 %v779, %v786
        %s788 = scalar_lea.vmem %s275, 2
        %789 = vst [vmem:[%s788] sm:$0x1] %v787
        %s790 = sadd.s32 %s427, 2
        %p791 = scmp.lt.s32.totalorder %s790, 17
        %s792 = scalar_select %p791, 1, 0
        %v793 = vstv %s792
        %vm794 = vcmp.eq.s32.totalorder %v793, 1
        %v795 = vsel %vm794, %v767, %v672
        %s796 = smul.u32 0, 2
        %s797 = smul.u32 %s796, 8
        %s798 = sadd.s32 %s797, 3
        %s799 = scalar_lea.vmem [#allocation2], %s798
        %v800 = vld [vmem:[%s799] ss:$8 sm:$0x3]
        %801 = vmatprep.subr.mxu0 %v396
        %802 = vmatpush1.msra.mxu0 %v395
        %803 = vmatprep.subr.mxu0 %v398
        %804 = vmatpush1.msra.mxu0 %v397
        %805 = vmatprep.subr.mxu0 %v400
        %806 = vmatpush1.msra.mxu0 %v399
        %807 = vmatprep.subr.mxu0 %v402
        %808 = vmatpush1.msra.mxu0 %v401
        %809 = vmatprep.subr.mxu0 %v404
        %810 = vmatpush1.msra.mxu0 %v403
        %811 = vmatprep.subr.mxu0 %v406
        %812 = vmatpush1.msra.mxu0 %v405
        %813 = vmatprep.subr.mxu0 %v408
        %814 = vmatpush1.msra.mxu0 %v407
        %815 = vmatprep.subr.mxu0 %v410
        %816 = vmatpush1.msra.mxu0 %v409
        %817 = vmatprep.subr.mxu0 %v412
        %818 = vmatpush1.msra.mxu0 %v411
        %819 = vmatprep.subr.mxu0 %v414
        %820 = vmatpush1.msra.mxu0 %v413
        %821 = vmatprep.subr.mxu0 %v416
        %822 = vmatpush1.msra.mxu0 %v415
        %823 = vmatprep.subr.mxu0 %v418
        %824 = vmatpush1.msra.mxu0 %v417
        %825 = vmatprep.subr.mxu0 %v420
        %826 = vmatpush1.msra.mxu0 %v419
        %827 = vmatprep.subr.mxu0 %v422
        %828 = vmatpush1.msra.mxu0 %v421
        %829 = vmatprep.subr.mxu0 %v424
        %830 = vmatpush1.msra.mxu0 %v423
        %831 = vmatprep.subr.mxu0 %v426
        %832 = vmatpush1.msra.mxu0 %v425
        %833 = vmatprep.subr.mxu0 0.0
        %834 = vmatpush1.msra.mxu0 0.0
        %835 = vmatprep.subr.mxu0 0.0
        %836 = vmatpush1.msra.mxu0 0.0
        %837 = vmatprep.subr.mxu0 0.0
        %838 = vmatpush1.msra.mxu0 0.0
        %839 = vmatprep.subr.mxu0 0.0
        %840 = vmatpush1.msra.mxu0 0.0
        %841 = vmatprep.subr.mxu0 0.0
        %842 = vmatpush1.msra.mxu0 0.0
        %843 = vmatprep.subr.mxu0 0.0
        %844 = vmatpush1.msra.mxu0 0.0
        %845 = vmatprep.subr.mxu0 0.0
        %846 = vmatpush1.msra.mxu0 0.0
        %847 = vmatprep.subr.mxu0 0.0
        %848 = vmatpush1.msra.mxu0 0.0
        %849 = vmatprep.subr.mxu0 0.0
        %850 = vmatpush1.msra.mxu0 0.0
        %851 = vmatprep.subr.mxu0 0.0
        %852 = vmatpush1.msra.mxu0 0.0
        %853 = vmatprep.subr.mxu0 0.0
        %854 = vmatpush1.msra.mxu0 0.0
        %855 = vmatprep.subr.mxu0 0.0
        %856 = vmatpush1.msra.mxu0 0.0
        %857 = vmatprep.subr.mxu0 0.0
        %858 = vmatpush1.msra.mxu0 0.0
        %859 = vmatprep.subr.mxu0 0.0
        %860 = vmatpush1.msra.mxu0 0.0
        %861 = vmatprep.subr.mxu0 0.0
        %862 = vmatpush1.msra.mxu0 0.0
        %863 = vmatprep.subr.mxu0 0.0
        %864 = vmatpush1.msra.mxu0 0.0
        %865 = vmatprep.mubr.f32.mxu0 0.0
        %866 = vmatmul.mubr.f32.gmra.mrb[0].mxu0 %v795
        %v867 = vpop.f32.mrb[0].mxu0
        %v868 = vadd.f32 0.0, %v867
        %v869 = vpop.f32.mrb[0].mxu0
        %v870 = vadd.f32 0.0, %v869
        %871 = vdwg.mxu0
        %v874 = vcombine.low %v868, %v870
        %v876 = vunpack.c.l.s4 1966171168
        %v877 = vunpack.c.0.s8 %v876
        %v878 = vlaneseq
        %v879 = vshrl.u32 %v878, 7
        %v880 = vsub.s32 %v877, %v879
        %v881 = vrot.slane %v874, %v880
        %v883 = vunpack.c.l.s4 1966171168
        %v884 = vunpack.c.0.s8 %v883
        %v885 = vlaneseq
        %v886 = vshrl.u32 %v885, 7
        %v887 = vsub.s32 %v884, %v886
        %v888 = vrot.slane %v881, %v887
        %v890 = vadd.f32 %v800, %v888
        %v892 = vlaneseq
        %v893 = vshrl.u32 %v892, 7
        %v894 = vsub.s32 1, %v893
        %v895 = vrot.slane %v890, %v894
        %v897 = vsel %vm315, %v895, -inf
        %898 = vmax.xlane.f32.xlu0 %v897
        %v899 = vpop.xlane.xlu0 %898
        %v900 = vrot.slane %v890, 1
        %v902 = vsub.f32 %v900, %v899
        %v903 = vmul.f32 %v902, 1.442695
        %v904 = vpow.pop %v903
        %v905 = vsel %vm315, %v904, 0.0
        %906 = vadd.xlane.f32.xlu0 %v905
        %v907 = vpop.xlane.xlu0 %906
        %v908 = vlog2.pop %v907
        %v909 = vmul.f32 %v908, 0.6931472
        %v910 = vsub.f32 %v902, %v909
        %s911 = scalar_lea.vmem %s275, 3
        %912 = vst [vmem:[%s911] sm:$0x1] %v910
        %s913 = sadd.s32 %s427, 3
        %p914 = scmp.lt.s32.totalorder %s913, 17
        %s915 = scalar_select %p914, 1, 0
        %v916 = vstv %s915
        %vm917 = vcmp.eq.s32.totalorder %v916, 1
        %v918 = vsel %vm917, %v890, %v795
        %s919 = smul.u32 0, 2
        %s920 = smul.u32 %s919, 8
        %s921 = sadd.s32 %s920, 4
        %s922 = scalar_lea.vmem [#allocation2], %s921
        %v923 = vld [vmem:[%s922] ss:$8 sm:$0x3]
        %924 = vmatprep.subr.mxu0 %v396
        %925 = vmatpush1.msra.mxu0 %v395
        %926 = vmatprep.subr.mxu0 %v398
        %927 = vmatpush1.msra.mxu0 %v397
        %928 = vmatprep.subr.mxu0 %v400
        %929 = vmatpush1.msra.mxu0 %v399
        %930 = vmatprep.subr.mxu0 %v402
        %931 = vmatpush1.msra.mxu0 %v401
        %932 = vmatprep.subr.mxu0 %v404
        %933 = vmatpush1.msra.mxu0 %v403
        %934 = vmatprep.subr.mxu0 %v406
        %935 = vmatpush1.msra.mxu0 %v405
        %936 = vmatprep.subr.mxu0 %v408
        %937 = vmatpush1.msra.mxu0 %v407
        %938 = vmatprep.subr.mxu0 %v410
        %939 = vmatpush1.msra.mxu0 %v409
        %940 = vmatprep.subr.mxu0 %v412
        %941 = vmatpush1.msra.mxu0 %v411
        %942 = vmatprep.subr.mxu0 %v414
        %943 = vmatpush1.msra.mxu0 %v413
        %944 = vmatprep.subr.mxu0 %v416
        %945 = vmatpush1.msra.mxu0 %v415
        %946 = vmatprep.subr.mxu0 %v418
        %947 = vmatpush1.msra.mxu0 %v417
        %948 = vmatprep.subr.mxu0 %v420
        %949 = vmatpush1.msra.mxu0 %v419
        %950 = vmatprep.subr.mxu0 %v422
        %951 = vmatpush1.msra.mxu0 %v421
        %952 = vmatprep.subr.mxu0 %v424
        %953 = vmatpush1.msra.mxu0 %v423
        %954 = vmatprep.subr.mxu0 %v426
        %955 = vmatpush1.msra.mxu0 %v425
        %956 = vmatprep.subr.mxu0 0.0
        %957 = vmatpush1.msra.mxu0 0.0
        %958 = vmatprep.subr.mxu0 0.0
        %959 = vmatpush1.msra.mxu0 0.0
        %960 = vmatprep.subr.mxu0 0.0
        %961 = vmatpush1.msra.mxu0 0.0
        %962 = vmatprep.subr.mxu0 0.0
        %963 = vmatpush1.msra.mxu0 0.0
        %964 = vmatprep.subr.mxu0 0.0
        %965 = vmatpush1.msra.mxu0 0.0
        %966 = vmatprep.subr.mxu0 0.0
        %967 = vmatpush1.msra.mxu0 0.0
        %968 = vmatprep.subr.mxu0 0.0
        %969 = vmatpush1.msra.mxu0 0.0
        %970 = vmatprep.subr.mxu0 0.0
        %971 = vmatpush1.msra.mxu0 0.0
        %972 = vmatprep.subr.mxu0 0.0
        %973 = vmatpush1.msra.mxu0 0.0
        %974 = vmatprep.subr.mxu0 0.0
        %975 = vmatpush1.msra.mxu0 0.0
        %976 = vmatprep.subr.mxu0 0.0
        %977 = vmatpush1.msra.mxu0 0.0
        %978 = vmatprep.subr.mxu0 0.0
        %979 = vmatpush1.msra.mxu0 0.0
        %980 = vmatprep.subr.mxu0 0.0
        %981 = vmatpush1.msra.mxu0 0.0
        %982 = vmatprep.subr.mxu0 0.0
        %983 = vmatpush1.msra.mxu0 0.0
        %984 = vmatprep.subr.mxu0 0.0
        %985 = vmatpush1.msra.mxu0 0.0
        %986 = vmatprep.subr.mxu0 0.0
        %987 = vmatpush1.msra.mxu0 0.0
        %988 = vmatprep.mubr.f32.mxu0 0.0
        %989 = vmatmul.mubr.f32.gmra.mrb[0].mxu0 %v918
        %v990 = vpop.f32.mrb[0].mxu0
        %v991 = vadd.f32 0.0, %v990
        %v992 = vpop.f32.mrb[0].mxu0
        %v993 = vadd.f32 0.0, %v992
        %994 = vdwg.mxu0
        %v997 = vcombine.low %v991, %v993
        %v999 = vunpack.c.l.s4 1966171168
        %v1000 = vunpack.c.0.s8 %v999
        %v1001 = vlaneseq
        %v1002 = vshrl.u32 %v1001, 7
        %v1003 = vsub.s32 %v1000, %v1002
        %v1004 = vrot.slane %v997, %v1003
        %v1006 = vunpack.c.l.s4 1966171168
        %v1007 = vunpack.c.0.s8 %v1006
        %v1008 = vlaneseq
        %v1009 = vshrl.u32 %v1008, 7
        %v1010 = vsub.s32 %v1007, %v1009
        %v1011 = vrot.slane %v1004, %v1010
        %v1013 = vadd.f32 %v923, %v1011
        %v1015 = vlaneseq
        %v1016 = vshrl.u32 %v1015, 7
        %v1017 = vsub.s32 1, %v1016
        %v1018 = vrot.slane %v1013, %v1017
        %v1020 = vsel %vm315, %v1018, -inf
        %1021 = vmax.xlane.f32.xlu0 %v1020
        %v1022 = vpop.xlane.xlu0 %1021
        %v1023 = vrot.slane %v1013, 1
        %v1025 = vsub.f32 %v1023, %v1022
        %v1026 = vmul.f32 %v1025, 1.442695
        %v1027 = vpow.pop %v1026
        %v1028 = vsel %vm315, %v1027, 0.0
        %1029 = vadd.xlane.f32.xlu0 %v1028
        %v1030 = vpop.xlane.xlu0 %1029
        %v1031 = vlog2.pop %v1030
        %v1032 = vmul.f32 %v1031, 0.6931472
        %v1033 = vsub.f32 %v1025, %v1032
        %s1034 = scalar_lea.vmem %s275, 4
        %1035 = vst [vmem:[%s1034] sm:$0x1] %v1033
        %s1036 = sadd.s32 %s427, 4
        %p1037 = scmp.lt.s32.totalorder %s1036, 17
        %s1038 = scalar_select %p1037, 1, 0
        %v1039 = vstv %s1038
        %vm1040 = vcmp.eq.s32.totalorder %v1039, 1
        %v1041 = vsel %vm1040, %v1013, %v918
        %s1042 = smul.u32 0, 2
        %s1043 = smul.u32 %s1042, 8
        %s1044 = sadd.s32 %s1043, 5
        %s1045 = scalar_lea.vmem [#allocation2], %s1044
        %v1046 = vld [vmem:[%s1045] ss:$8 sm:$0x3]
        %1047 = vmatprep.subr.mxu0 %v396
        %1048 = vmatpush1.msra.mxu0 %v395
        %1049 = vmatprep.subr.mxu0 %v398
        %1050 = vmatpush1.msra.mxu0 %v397
        %1051 = vmatprep.subr.mxu0 %v400
        %1052 = vmatpush1.msra.mxu0 %v399
        %1053 = vmatprep.subr.mxu0 %v402
        %1054 = vmatpush1.msra.mxu0 %v401
        %1055 = vmatprep.subr.mxu0 %v404
        %1056 = vmatpush1.msra.mxu0 %v403
        %1057 = vmatprep.subr.mxu0 %v406
        %1058 = vmatpush1.msra.mxu0 %v405
        %1059 = vmatprep.subr.mxu0 %v408
        %1060 = vmatpush1.msra.mxu0 %v407
        %1061 = vmatprep.subr.mxu0 %v410
        %1062 = vmatpush1.msra.mxu0 %v409
        %1063 = vmatprep.subr.mxu0 %v412
        %1064 = vmatpush1.msra.mxu0 %v411
        %1065 = vmatprep.subr.mxu0 %v414
        %1066 = vmatpush1.msra.mxu0 %v413
        %1067 = vmatprep.subr.mxu0 %v416
        %1068 = vmatpush1.msra.mxu0 %v415
        %1069 = vmatprep.subr.mxu0 %v418
        %1070 = vmatpush1.msra.mxu0 %v417
        %1071 = vmatprep.subr.mxu0 %v420
        %1072 = vmatpush1.msra.mxu0 %v419
        %1073 = vmatprep.subr.mxu0 %v422
        %1074 = vmatpush1.msra.mxu0 %v421
        %1075 = vmatprep.subr.mxu0 %v424
        %1076 = vmatpush1.msra.mxu0 %v423
        %1077 = vmatprep.subr.mxu0 %v426
        %1078 = vmatpush1.msra.mxu0 %v425
        %1079 = vmatprep.subr.mxu0 0.0
        %1080 = vmatpush1.msra.mxu0 0.0
        %1081 = vmatprep.subr.mxu0 0.0
        %1082 = vmatpush1.msra.mxu0 0.0
        %1083 = vmatprep.subr.mxu0 0.0
        %1084 = vmatpush1.msra.mxu0 0.0
        %1085 = vmatprep.subr.mxu0 0.0
        %1086 = vmatpush1.msra.mxu0 0.0
        %1087 = vmatprep.subr.mxu0 0.0
        %1088 = vmatpush1.msra.mxu0 0.0
        %1089 = vmatprep.subr.mxu0 0.0
        %1090 = vmatpush1.msra.mxu0 0.0
        %1091 = vmatprep.subr.mxu0 0.0
        %1092 = vmatpush1.msra.mxu0 0.0
        %1093 = vmatprep.subr.mxu0 0.0
        %1094 = vmatpush1.msra.mxu0 0.0
        %1095 = vmatprep.subr.mxu0 0.0
        %1096 = vmatpush1.msra.mxu0 0.0
        %1097 = vmatprep.subr.mxu0 0.0
        %1098 = vmatpush1.msra.mxu0 0.0
        %1099 = vmatprep.subr.mxu0 0.0
        %1100 = vmatpush1.msra.mxu0 0.0
        %1101 = vmatprep.subr.mxu0 0.0
        %1102 = vmatpush1.msra.mxu0 0.0
        %1103 = vmatprep.subr.mxu0 0.0
        %1104 = vmatpush1.msra.mxu0 0.0
        %1105 = vmatprep.subr.mxu0 0.0
        %1106 = vmatpush1.msra.mxu0 0.0
        %1107 = vmatprep.subr.mxu0 0.0
        %1108 = vmatpush1.msra.mxu0 0.0
        %1109 = vmatprep.subr.mxu0 0.0
        %1110 = vmatpush1.msra.mxu0 0.0
        %1111 = vmatprep.mubr.f32.mxu0 0.0
        %1112 = vmatmul.mubr.f32.gmra.mrb[0].mxu0 %v1041
        %v1113 = vpop.f32.mrb[0].mxu0
        %v1114 = vadd.f32 0.0, %v1113
        %v1115 = vpop.f32.mrb[0].mxu0
        %v1116 = vadd.f32 0.0, %v1115
        %1117 = vdwg.mxu0
        %v1120 = vcombine.low %v1114, %v1116
        %v1122 = vunpack.c.l.s4 1966171168
        %v1123 = vunpack.c.0.s8 %v1122
        %v1124 = vlaneseq
        %v1125 = vshrl.u32 %v1124, 7
        %v1126 = vsub.s32 %v1123, %v1125
        %v1127 = vrot.slane %v1120, %v1126
        %v1129 = vunpack.c.l.s4 1966171168
        %v1130 = vunpack.c.0.s8 %v1129
        %v1131 = vlaneseq
        %v1132 = vshrl.u32 %v1131, 7
        %v1133 = vsub.s32 %v1130, %v1132
        %v1134 = vrot.slane %v1127, %v1133
        %v1136 = vadd.f32 %v1046, %v1134
        %v1138 = vlaneseq
        %v1139 = vshrl.u32 %v1138, 7
        %v1140 = vsub.s32 1, %v1139
        %v1141 = vrot.slane %v1136, %v1140
        %v1143 = vsel %vm315, %v1141, -inf
        %1144 = vmax.xlane.f32.xlu0 %v1143
        %v1145 = vpop.xlane.xlu0 %1144
        %v1146 = vrot.slane %v1136, 1
        %v1148 = vsub.f32 %v1146, %v1145
        %v1149 = vmul.f32 %v1148, 1.442695
        %v1150 = vpow.pop %v1149
        %v1151 = vsel %vm315, %v1150, 0.0
        %1152 = vadd.xlane.f32.xlu0 %v1151
        %v1153 = vpop.xlane.xlu0 %1152
        %v1154 = vlog2.pop %v1153
        %v1155 = vmul.f32 %v1154, 0.6931472
        %v1156 = vsub.f32 %v1148, %v1155
        %s1157 = scalar_lea.vmem %s275, 5
        %1158 = vst [vmem:[%s1157] sm:$0x1] %v1156
        %s1159 = sadd.s32 %s427, 5
        %p1160 = scmp.lt.s32.totalorder %s1159, 17
        %s1161 = scalar_select %p1160, 1, 0
        %v1162 = vstv %s1161
        %vm1163 = vcmp.eq.s32.totalorder %v1162, 1
        %v1164 = vsel %vm1163, %v1136, %v1041
        %s1165 = smul.u32 0, 2
        %s1166 = smul.u32 %s1165, 8
        %s1167 = sadd.s32 %s1166, 6
        %s1168 = scalar_lea.vmem [#allocation2], %s1167
        %v1169 = vld [vmem:[%s1168] ss:$8 sm:$0x3]
        %1170 = vmatprep.subr.mxu0 %v396
        %1171 = vmatpush1.msra.mxu0 %v395
        %1172 = vmatprep.subr.mxu0 %v398
        %1173 = vmatpush1.msra.mxu0 %v397
        %1174 = vmatprep.subr.mxu0 %v400
        %1175 = vmatpush1.msra.mxu0 %v399
        %1176 = vmatprep.subr.mxu0 %v402
        %1177 = vmatpush1.msra.mxu0 %v401
        %1178 = vmatprep.subr.mxu0 %v404
        %1179 = vmatpush1.msra.mxu0 %v403
        %1180 = vmatprep.subr.mxu0 %v406
        %1181 = vmatpush1.msra.mxu0 %v405
        %1182 = vmatprep.subr.mxu0 %v408
        %1183 = vmatpush1.msra.mxu0 %v407
        %1184 = vmatprep.subr.mxu0 %v410
        %1185 = vmatpush1.msra.mxu0 %v409
        %1186 = vmatprep.subr.mxu0 %v412
        %1187 = vmatpush1.msra.mxu0 %v411
        %1188 = vmatprep.subr.mxu0 %v414
        %1189 = vmatpush1.msra.mxu0 %v413
        %1190 = vmatprep.subr.mxu0 %v416
        %1191 = vmatpush1.msra.mxu0 %v415
        %1192 = vmatprep.subr.mxu0 %v418
        %1193 = vmatpush1.msra.mxu0 %v417
        %1194 = vmatprep.subr.mxu0 %v420
        %1195 = vmatpush1.msra.mxu0 %v419
        %1196 = vmatprep.subr.mxu0 %v422
        %1197 = vmatpush1.msra.mxu0 %v421
        %1198 = vmatprep.subr.mxu0 %v424
        %1199 = vmatpush1.msra.mxu0 %v423
        %1200 = vmatprep.subr.mxu0 %v426
        %1201 = vmatpush1.msra.mxu0 %v425
        %1202 = vmatprep.subr.mxu0 0.0
        %1203 = vmatpush1.msra.mxu0 0.0
        %1204 = vmatprep.subr.mxu0 0.0
        %1205 = vmatpush1.msra.mxu0 0.0
        %1206 = vmatprep.subr.mxu0 0.0
        %1207 = vmatpush1.msra.mxu0 0.0
        %1208 = vmatprep.subr.mxu0 0.0
        %1209 = vmatpush1.msra.mxu0 0.0
        %1210 = vmatprep.subr.mxu0 0.0
        %1211 = vmatpush1.msra.mxu0 0.0
        %1212 = vmatprep.subr.mxu0 0.0
        %1213 = vmatpush1.msra.mxu0 0.0
        %1214 = vmatprep.subr.mxu0 0.0
        %1215 = vmatpush1.msra.mxu0 0.0
        %1216 = vmatprep.subr.mxu0 0.0
        %1217 = vmatpush1.msra.mxu0 0.0
        %1218 = vmatprep.subr.mxu0 0.0
        %1219 = vmatpush1.msra.mxu0 0.0
        %1220 = vmatprep.subr.mxu0 0.0
        %1221 = vmatpush1.msra.mxu0 0.0
        %1222 = vmatprep.subr.mxu0 0.0
        %1223 = vmatpush1.msra.mxu0 0.0
        %1224 = vmatprep.subr.mxu0 0.0
        %1225 = vmatpush1.msra.mxu0 0.0
        %1226 = vmatprep.subr.mxu0 0.0
        %1227 = vmatpush1.msra.mxu0 0.0
        %1228 = vmatprep.subr.mxu0 0.0
        %1229 = vmatpush1.msra.mxu0 0.0
        %1230 = vmatprep.subr.mxu0 0.0
        %1231 = vmatpush1.msra.mxu0 0.0
        %1232 = vmatprep.subr.mxu0 0.0
        %1233 = vmatpush1.msra.mxu0 0.0
        %1234 = vmatprep.mubr.f32.mxu0 0.0
        %1235 = vmatmul.mubr.f32.gmra.mrb[0].mxu0 %v1164
        %v1236 = vpop.f32.mrb[0].mxu0
        %v1237 = vadd.f32 0.0, %v1236
        %v1238 = vpop.f32.mrb[0].mxu0
        %v1239 = vadd.f32 0.0, %v1238
        %1240 = vdwg.mxu0
        %v1243 = vcombine.low %v1237, %v1239
        %v1245 = vunpack.c.l.s4 1966171168
        %v1246 = vunpack.c.0.s8 %v1245
        %v1247 = vlaneseq
        %v1248 = vshrl.u32 %v1247, 7
        %v1249 = vsub.s32 %v1246, %v1248
        %v1250 = vrot.slane %v1243, %v1249
        %v1252 = vunpack.c.l.s4 1966171168
        %v1253 = vunpack.c.0.s8 %v1252
        %v1254 = vlaneseq
        %v1255 = vshrl.u32 %v1254, 7
        %v1256 = vsub.s32 %v1253, %v1255
        %v1257 = vrot.slane %v1250, %v1256
        %v1259 = vadd.f32 %v1169, %v1257
        %v1261 = vlaneseq
        %v1262 = vshrl.u32 %v1261, 7
        %v1263 = vsub.s32 1, %v1262
        %v1264 = vrot.slane %v1259, %v1263
        %v1266 = vsel %vm315, %v1264, -inf
        %1267 = vmax.xlane.f32.xlu0 %v1266
        %v1268 = vpop.xlane.xlu0 %1267
        %v1269 = vrot.slane %v1259, 1
        %v1271 = vsub.f32 %v1269, %v1268
        %v1272 = vmul.f32 %v1271, 1.442695
        %v1273 = vpow.pop %v1272
        %v1274 = vsel %vm315, %v1273, 0.0
        %1275 = vadd.xlane.f32.xlu0 %v1274
        %v1276 = vpop.xlane.xlu0 %1275
        %v1277 = vlog2.pop %v1276
        %v1278 = vmul.f32 %v1277, 0.6931472
        %v1279 = vsub.f32 %v1271, %v1278
        %s1280 = scalar_lea.vmem %s275, 6
        %1281 = vst [vmem:[%s1280] sm:$0x1] %v1279
        %s1282 = sadd.s32 %s427, 6
        %p1283 = scmp.lt.s32.totalorder %s1282, 17
        %s1284 = scalar_select %p1283, 1, 0
        %v1285 = vstv %s1284
        %vm1286 = vcmp.eq.s32.totalorder %v1285, 1
        %v1287 = vsel %vm1286, %v1259, %v1164
        %s1288 = smul.u32 0, 2
        %s1289 = smul.u32 %s1288, 8
        %s1290 = sadd.s32 %s1289, 7
        %s1291 = scalar_lea.vmem [#allocation2], %s1290
        %v1292 = vld [vmem:[%s1291] ss:$8 sm:$0x3]
        %1293 = vmatprep.subr.mxu0 %v396
        %1294 = vmatpush1.msra.mxu0 %v395
        %1295 = vmatprep.subr.mxu0 %v398
        %1296 = vmatpush1.msra.mxu0 %v397
        %1297 = vmatprep.subr.mxu0 %v400
        %1298 = vmatpush1.msra.mxu0 %v399
        %1299 = vmatprep.subr.mxu0 %v402
        %1300 = vmatpush1.msra.mxu0 %v401
        %1301 = vmatprep.subr.mxu0 %v404
        %1302 = vmatpush1.msra.mxu0 %v403
        %1303 = vmatprep.subr.mxu0 %v406
        %1304 = vmatpush1.msra.mxu0 %v405
        %1305 = vmatprep.subr.mxu0 %v408
        %1306 = vmatpush1.msra.mxu0 %v407
        %1307 = vmatprep.subr.mxu0 %v410
        %1308 = vmatpush1.msra.mxu0 %v409
        %1309 = vmatprep.subr.mxu0 %v412
        %1310 = vmatpush1.msra.mxu0 %v411
        %1311 = vmatprep.subr.mxu0 %v414
        %1312 = vmatpush1.msra.mxu0 %v413
        %1313 = vmatprep.subr.mxu0 %v416
        %1314 = vmatpush1.msra.mxu0 %v415
        %1315 = vmatprep.subr.mxu0 %v418
        %1316 = vmatpush1.msra.mxu0 %v417
        %1317 = vmatprep.subr.mxu0 %v420
        %1318 = vmatpush1.msra.mxu0 %v419
        %1319 = vmatprep.subr.mxu0 %v422
        %1320 = vmatpush1.msra.mxu0 %v421
        %1321 = vmatprep.subr.mxu0 %v424
        %1322 = vmatpush1.msra.mxu0 %v423
        %1323 = vmatprep.subr.mxu0 %v426
        %1324 = vmatpush1.msra.mxu0 %v425
        %1325 = vmatprep.subr.mxu0 0.0
        %1326 = vmatpush1.msra.mxu0 0.0
        %1327 = vmatprep.subr.mxu0 0.0
        %1328 = vmatpush1.msra.mxu0 0.0
        %1329 = vmatprep.subr.mxu0 0.0
        %1330 = vmatpush1.msra.mxu0 0.0
        %1331 = vmatprep.subr.mxu0 0.0
        %1332 = vmatpush1.msra.mxu0 0.0
        %1333 = vmatprep.subr.mxu0 0.0
        %1334 = vmatpush1.msra.mxu0 0.0
        %1335 = vmatprep.subr.mxu0 0.0
        %1336 = vmatpush1.msra.mxu0 0.0
        %1337 = vmatprep.subr.mxu0 0.0
        %1338 = vmatpush1.msra.mxu0 0.0
        %1339 = vmatprep.subr.mxu0 0.0
        %1340 = vmatpush1.msra.mxu0 0.0
        %1341 = vmatprep.subr.mxu0 0.0
        %1342 = vmatpush1.msra.mxu0 0.0
        %1343 = vmatprep.subr.mxu0 0.0
        %1344 = vmatpush1.msra.mxu0 0.0
        %1345 = vmatprep.subr.mxu0 0.0
        %1346 = vmatpush1.msra.mxu0 0.0
        %1347 = vmatprep.subr.mxu0 0.0
        %1348 = vmatpush1.msra.mxu0 0.0
        %1349 = vmatprep.subr.mxu0 0.0
        %1350 = vmatpush1.msra.mxu0 0.0
        %1351 = vmatprep.subr.mxu0 0.0
        %1352 = vmatpush1.msra.mxu0 0.0
        %1353 = vmatprep.subr.mxu0 0.0
        %1354 = vmatpush1.msra.mxu0 0.0
        %1355 = vmatprep.subr.mxu0 0.0
        %1356 = vmatpush1.msra.mxu0 0.0
        %1357 = vmatprep.mubr.f32.mxu0 0.0
        %1358 = vmatmul.mubr.f32.gmra.mrb[0].mxu0 %v1287
        %v1359 = vpop.f32.mrb[0].mxu0
        %v1360 = vadd.f32 0.0, %v1359
        %v1361 = vpop.f32.mrb[0].mxu0
        %v1362 = vadd.f32 0.0, %v1361
        %1363 = vdwg.mxu0
        %v1366 = vcombine.low %v1360, %v1362
        %v1368 = vunpack.c.l.s4 1966171168
        %v1369 = vunpack.c.0.s8 %v1368
        %v1370 = vlaneseq
        %v1371 = vshrl.u32 %v1370, 7
        %v1372 = vsub.s32 %v1369, %v1371
        %v1373 = vrot.slane %v1366, %v1372
        %v1375 = vunpack.c.l.s4 1966171168
        %v1376 = vunpack.c.0.s8 %v1375
        %v1377 = vlaneseq
        %v1378 = vshrl.u32 %v1377, 7
        %v1379 = vsub.s32 %v1376, %v1378
        %v1380 = vrot.slane %v1373, %v1379
        %v1382 = vadd.f32 %v1292, %v1380
        %v1384 = vlaneseq
        %v1385 = vshrl.u32 %v1384, 7
        %v1386 = vsub.s32 1, %v1385
        %v1387 = vrot.slane %v1382, %v1386
        %v1389 = vsel %vm315, %v1387, -inf
        %1390 = vmax.xlane.f32.xlu0 %v1389
        %v1391 = vpop.xlane.xlu0 %1390
        %v1392 = vrot.slane %v1382, 1
        %v1394 = vsub.f32 %v1392, %v1391
        %v1395 = vmul.f32 %v1394, 1.442695
        %v1396 = vpow.pop %v1395
        %v1397 = vsel %vm315, %v1396, 0.0
        %1398 = vadd.xlane.f32.xlu0 %v1397
        %v1399 = vpop.xlane.xlu0 %1398
        %v1400 = vlog2.pop %v1399
        %v1401 = vmul.f32 %v1400, 0.6931472
        %v1402 = vsub.f32 %v1394, %v1401
        %s1403 = scalar_lea.vmem %s275, 7
        %1404 = vst [vmem:[%s1403] sm:$0x1] %v1402
        %s1405 = sadd.s32 %s427, 7
        %p1406 = scmp.lt.s32.totalorder %s1405, 17
        %s1407 = scalar_select %p1406, 1, 0
        %v1408 = vstv %s1407
        %vm1409 = vcmp.eq.s32.totalorder %v1408, 1
        %v1410 = vsel %vm1409, %v1382, %v1287
        %1411 = vst [vmem:[#allocation8] sm:$0x1] %v1410
        %p1412 = scmp.lt.s32.totalorder %s21, 2
        %s1413 = scalar_select %p1412, %s21, 2
        %s1414 = smul.addr %s1413, 8
        %s1415 = scalar_lea.vmem %s5, %s1414
        // Predicated region
        $region53: #{rnn_sequence.1} parent=39 // pred_check
          %p1416 = pneg %p149
        $region54: #{rnn_sequence.1} parent=39 // pred_check_branch
          %1418 = sbr.rel (%p1416) target = $region56
        $region55: #{rnn_sequence.1} parent=39 // pred_region
          _
        $region56: #{rnn_sequence.1} parent=39 // pred_fallthru
          _
        // Predicated region
        $region57: #{rnn_sequence.1} parent=39 // pred_check
          %p1419 = pneg %p170
        $region58: #{rnn_sequence.1} parent=39 // pred_check_branch
          %1421 = sbr.rel (%p1419) target = $region60
        $region59: #{rnn_sequence.1} parent=39 // pred_region
          %s1423 = ssub.s32 16, 16
          %1424 = vsyncadd [#allocation5], %s1423
          %s1426 = sshll.u32 [#allocation8], 4
          %s1427 = int_to_ptr.vmem [resolvable:$true] %s1426
          %1429 = dma.vmem_to_hbm [thread:$0]  %s1427, 16, %s6, [#allocation5]
        $region60: #{rnn_sequence.1} parent=39 // pred_fallthru
          _
        // Predicated region
        $region61: #{rnn_sequence.1} parent=39 // pred_check
          %p1430 = pneg %p170
        $region62: #{rnn_sequence.1} parent=39 // pred_check_branch
          %1432 = sbr.rel (%p1430) target = $region64
        $region63: #{rnn_sequence.1} parent=39 // pred_region
          %1433 = dma.done [#allocation5], 16
        $region64: #{rnn_sequence.1} parent=39 // pred_fallthru
          _
      $region40: #{rnn_sequence.1} parent=5 // pred_fallthru
        _
      %p1434 = scmp.le.s32.totalorder 2, %s16
      // Predicated region
      $region65: #{rnn_sequence.1} parent=5 // pred_check
        %p1435 = pneg %p1434
      $region66: #{rnn_sequence.1} parent=5 // pred_check_branch
        %1437 = sbr.rel (%p1435) target = $region68
      $region67: #{rnn_sequence.1} parent=5 // pred_region
        %s1438 = ssub.s32 %s16, 2
        // Predicated region
        $region69: #{rnn_sequence.1} parent=67 // pred_check
          %p1439 = pneg %p155
        $region70: #{rnn_sequence.1} parent=67 // pred_check_branch
          %1441 = sbr.rel (%p1439) target = $region72
        $region71: #{rnn_sequence.1} parent=67 // pred_region
          %p1442 = scmp.lt.s32.totalorder %s22, 2
          %s1443 = scalar_select %p1442, %s22, 2
          %s1444 = smul.addr %s1443, 8
          %s1445 = scalar_lea.vmem %s5, %s1444
        $region72: #{rnn_sequence.1} parent=67 // pred_fallthru
          _
      $region68: #{rnn_sequence.1} parent=5 // pred_fallthru
        _
    $region6: #{rnn_sequence.1} parent=1 // loop_footer
      %s20 = sadd.s32 1, %s16
    $region7: #{rnn_sequence.1} parent=1 // loop_footer_branch
      %15 = sbr.rel target = $region3
    $region8: #{rnn_sequence.1} parent=1 // loop_exit
      _
    %1446 = vsyncpa [#allocation4], 1
    %s1447 = scalar_lea.sflag [#allocation4], 1
    %1448 = vsyncpa %s1447, 1
    %1449 = vsyncpa [#allocation7], 1
    %1450 = vsyncpa [#allocation5], 1
    %s1451 = scalar_lea.sflag [#allocation5], 1
    %1452 = vsyncpa %s1451, 1

</llo_original>
